<compile_context>
chip_gen: v6e
topology: v6e:2x2x1
jax: 0.10.0
libtpu: 0.0.40
codegen_flags: <defaults>
</compile_context>

<pallas_src>
import functools

import jax
import jax.numpy as jnp
from jax import lax
from jax.experimental import pallas as pl
from jax.experimental.pallas import tpu as pltpu

# ----- small synthetic config (stands in for BertConfig / pretrained weights) -----
VOCAB = 64
HIDDEN = 128
NUM_HEADS = 4
HEAD_DIM = HIDDEN // NUM_HEADS
INTERMEDIATE = 256
NUM_LAYERS = 2
MAX_POS = 32
NUM_LABELS = 2
LOGIT_PAD = 128            # classifier output padded to a full lane group
LN_EPS = 1e-12
INIT_RANGE = 0.02
VMEM_LIMIT_BYTES = 48 * 1024 * 1024   # > v5e 16 MiB scoped default, < v7x 64 MiB physical


def _pick_tile_m(m, max_tile=512):
    """Largest multiple-of-8 divisor of m (<= max_tile).

    Single largest tile: v5e/v6e have one TensorCore so splitting small M only adds
    ~0.35us/step grid overhead.  TODO(synk): on v7x prefer >=2 blocks (2 TCs).
    """
    cands = [t for t in range(8, min(m, max_tile) + 1, 8) if m % t == 0]
    return max(cands) if cands else m


# ---------------------------- Pallas kernels ----------------------------

def _emb_ln_kernel(tok_ref, pos_ref, typ_ref, g_ref, b_ref, o_ref):
    # fused embedding sum + LayerNorm (no (M,H) f32 temp in HBM)
    h = tok_ref[...] + pos_ref[...] + typ_ref[...]
    mu = jnp.mean(h, axis=-1, keepdims=True)
    var = jnp.mean(jnp.square(h - mu), axis=-1, keepdims=True)
    o_ref[...] = ((h - mu) * lax.rsqrt(var + LN_EPS) * g_ref[...] + b_ref[...]
                  ).astype(o_ref.dtype)


def _attn_block_kernel(x_ref, mask_ref, qkv_w_ref, qkv_b_ref, o_w_ref, o_b_ref,
                       g_ref, beta_ref, o_ref, *, scale):
    # One kernel per batch row: qkv projection, per-head attention, output
    # projection, residual and LayerNorm -- qkv/ctx never leave VMEM.
    x = x_ref[0]                                          # (S, H) bf16
    seq = x.shape[0]
    qkv = jnp.dot(x, qkv_w_ref[...],
                  preferred_element_type=jnp.float32) + qkv_b_ref[...]   # (S, 3H) f32

    # hoist the (S,S) additive-mask broadcast out of the head loop (no CSE in JAX)
    mask_b = jnp.broadcast_to(mask_ref[0], (seq, seq))

    # TODO(synk): at real S=512 replace this static unroll with a fori_loop /
    # flash-style q-tiled grid axis so the (S,S) score tiles do not blow vreg
    # live ranges; at S=8, NUM_HEADS=4 the unroll is tiny and spill-free.
    ctx_heads = []
    for hd in range(NUM_HEADS):
        lo = hd * HEAD_DIM
        hi = lo + HEAD_DIM
        qh = qkv[:, lo:hi].astype(jnp.bfloat16)
        kh = qkv[:, HIDDEN + lo:HIDDEN + hi].astype(jnp.bfloat16)
        vh = qkv[:, 2 * HIDDEN + lo:2 * HIDDEN + hi].astype(jnp.bfloat16)
        s = lax.dot_general(qh, kh, (((1,), (1,)), ((), ())),
                            preferred_element_type=jnp.float32) * scale + mask_b
        s = s - jnp.max(s, axis=-1, keepdims=True)
        p = jnp.exp(s)
        p = p * pl.reciprocal(jnp.sum(p, axis=-1, keepdims=True), approx=True)
        ctx_heads.append(jnp.dot(p.astype(jnp.bfloat16), vh,
                                 preferred_element_type=jnp.float32))
    ctx = jnp.concatenate(ctx_heads, axis=-1)             # (S, H) f32, lane-dense slab

    # output projection + residual + LayerNorm, one lane-dense store
    y = jnp.dot(ctx.astype(jnp.bfloat16), o_w_ref[...],
                preferred_element_type=jnp.float32) + o_b_ref[...]
    hst = y + x.astype(jnp.float32)
    mu = jnp.mean(hst, axis=-1, keepdims=True)
    var = jnp.mean(jnp.square(hst - mu), axis=-1, keepdims=True)
    o_ref[0] = ((hst - mu) * lax.rsqrt(var + LN_EPS) * g_ref[...] + beta_ref[...]
                ).astype(o_ref.dtype)


def _ffn_kernel(x_ref, wi_ref, bi_ref, wf_ref, bf_ref, g_ref, beta_ref, o_ref):
    # H -> INTERMEDIATE -> H with the intermediate kept entirely in VMEM,
    # residual + LayerNorm fused into the epilogue.
    x = x_ref[...]                                        # (tm, H) bf16
    h = jnp.dot(x, wi_ref[...], preferred_element_type=jnp.float32) + bi_ref[...]
    # TODO(synk): HF BERT uses exact (erf) GELU; tanh-approx GELU used here.
    h = jax.nn.gelu(h, approximate=True)
    y = jnp.dot(h.astype(jnp.bfloat16), wf_ref[...],
                preferred_element_type=jnp.float32) + bf_ref[...]
    h2 = y + x.astype(jnp.float32)
    mu = jnp.mean(h2, axis=-1, keepdims=True)
    var = jnp.mean(jnp.square(h2 - mu), axis=-1, keepdims=True)
    o_ref[...] = ((h2 - mu) * lax.rsqrt(var + LN_EPS) * g_ref[...] + beta_ref[...]
                  ).astype(o_ref.dtype)


def _pool_cls_kernel(x_ref, pw_ref, pb_ref, cw_ref, cb_ref, logits_ref):
    # pooler (dense + tanh on every token, as in the reference module) + classifier;
    # fully "parallel" grid (no carried accumulators).
    pooled = jnp.tanh(jnp.dot(x_ref[...], pw_ref[...],
                              preferred_element_type=jnp.float32) + pb_ref[...])
    logits = jnp.dot(pooled.astype(jnp.bfloat16), cw_ref[...],
                     preferred_element_type=jnp.float32) + cb_ref[...]
    logits_ref[...] = logits                              # lane-padded (tm, 128) slab


def _ce_loss_kernel(logits_ref, lab_ref, stats_ref):
    # Tiny cross-entropy reduction.  The four accumulators (span_sum, span_cnt,
    # zero_sum, zero_cnt) are merged into one lane-dense (1, 128) output.
    @pl.when(pl.program_id(0) == 0)
    def _():
        stats_ref[...] = jnp.zeros_like(stats_ref)

    l2 = logits_ref[...][:, 0:NUM_LABELS]                 # (tm, 2) f32
    y = lab_ref[...]                                      # (tm, 1), values 0/1
    m = jnp.max(l2, axis=-1, keepdims=True)
    lse = m + jnp.log(jnp.sum(jnp.exp(l2 - m), axis=-1, keepdims=True))
    picked = (1.0 - y) * l2[:, 0:1] + y * l2[:, 1:2]
    ce = lse - picked                                     # per-token CE, (tm, 1)
    span_mask = (y == 1.0).astype(jnp.float32)
    zero_mask = (y == 0.0).astype(jnp.float32)

    tm = l2.shape[0]
    lane = lax.broadcasted_iota(jnp.int32, (tm, LOGIT_PAD), 1)
    contrib = (jnp.where(lane == 0, ce * span_mask, 0.0)
               + jnp.where(lane == 1, span_mask, 0.0)
               + jnp.where(lane == 2, ce * zero_mask, 0.0)
               + jnp.where(lane == 3, zero_mask, 0.0))
    stats_ref[...] += jnp.sum(contrib, axis=0, keepdims=True)


# ---------------------------- pallas_call wrappers ----------------------------

def embed_layernorm(tok, pos, typ_row, gamma, beta):
    M, H = tok.shape
    tm = _pick_tile_m(M)
    vec = pl.BlockSpec((1, H), lambda i: (0, 0))
    return pl.pallas_call(
        _emb_ln_kernel,
        out_shape=jax.ShapeDtypeStruct((M, H), jnp.bfloat16),
        grid=(M // tm,),
        in_specs=[pl.BlockSpec((tm, H), lambda i: (i, 0)),
                  pl.BlockSpec((tm, H), lambda i: (i, 0)),
                  vec, vec, vec],
        out_specs=pl.BlockSpec((tm, H), lambda i: (i, 0)),
        compiler_params=pltpu.CompilerParams(dimension_semantics=("parallel",)),
    )(tok, pos, typ_row, gamma, beta)


def attention_block(x3d, add_mask, lyr):
    """x3d: (B, S, H) bf16; add_mask: (B, 1, S) additive mask."""
    B, S, H = x3d.shape
    scale = 1.0 / (HEAD_DIM ** 0.5)
    vec3h = pl.BlockSpec((1, 3 * H), lambda b: (0, 0))
    vech = pl.BlockSpec((1, H), lambda b: (0, 0))
    # TODO(synk): at real hidden=768, mark the constant-index weight specs
    # pipeline_mode=pl.Buffered(1) (or tile the 3H axis) to cap VMEM on v7x.
    return pl.pallas_call(
        functools.partial(_attn_block_kernel, scale=scale),
        out_shape=jax.ShapeDtypeStruct((B, S, H), jnp.bfloat16),
        grid=(B,),
        in_specs=[pl.BlockSpec((1, S, H), lambda b: (b, 0, 0)),
                  pl.BlockSpec((1, 1, S), lambda b: (b, 0, 0)),
                  pl.BlockSpec((H, 3 * H), lambda b: (0, 0)),
                  vec3h,
                  pl.BlockSpec((H, H), lambda b: (0, 0)),
                  vech, vech, vech],
        out_specs=pl.BlockSpec((1, S, H), lambda b: (b, 0, 0)),
        compiler_params=pltpu.CompilerParams(
            dimension_semantics=("parallel",),
            vmem_limit_bytes=VMEM_LIMIT_BYTES),
    )(x3d, add_mask, lyr["qkv_w"], lyr["qkv_b"], lyr["o_w"], lyr["o_b"],
      lyr["attn_ln_g"], lyr["attn_ln_b"])


def ffn_block(x, wi, bi, wf, bf_, gamma, beta):
    M, H = x.shape
    I = wi.shape[1]
    tm = _pick_tile_m(M)
    vech = pl.BlockSpec((1, H), lambda i: (0, 0))
    return pl.pallas_call(
        _ffn_kernel,
        out_shape=jax.ShapeDtypeStruct((M, H), jnp.bfloat16),
        grid=(M // tm,),
        in_specs=[pl.BlockSpec((tm, H), lambda i: (i, 0)),
                  pl.BlockSpec((H, I), lambda i: (0, 0)),
                  pl.BlockSpec((1, I), lambda i: (0, 0)),
                  pl.BlockSpec((I, H), lambda i: (0, 0)),
                  vech, vech, vech],
        out_specs=pl.BlockSpec((tm, H), lambda i: (i, 0)),
        compiler_params=pltpu.CompilerParams(
            dimension_semantics=("parallel",),
            vmem_limit_bytes=VMEM_LIMIT_BYTES),
    )(x, wi, bi, wf, bf_, gamma, beta)


def pool_classify(x, pw, pb, cw_pad, cb_pad):
    M, H = x.shape
    NP = cw_pad.shape[1]
    tm = _pick_tile_m(M)
    return pl.pallas_call(
        _pool_cls_kernel,
        out_shape=jax.ShapeDtypeStruct((M, NP), jnp.float32),
        grid=(M // tm,),
        in_specs=[pl.BlockSpec((tm, H), lambda i: (i, 0)),
                  pl.BlockSpec((H, H), lambda i: (0, 0)),
                  pl.BlockSpec((1, H), lambda i: (0, 0)),
                  pl.BlockSpec((H, NP), lambda i: (0, 0)),
                  pl.BlockSpec((1, NP), lambda i: (0, 0))],
        out_specs=pl.BlockSpec((tm, NP), lambda i: (i, 0)),
        compiler_params=pltpu.CompilerParams(dimension_semantics=("parallel",)),
    )(x, pw, pb, cw_pad, cb_pad)


def ce_loss_stats(logits_pad, labels_f):
    M, NP = logits_pad.shape
    tm = _pick_tile_m(M)
    return pl.pallas_call(
        _ce_loss_kernel,
        out_shape=jax.ShapeDtypeStruct((1, NP), jnp.float32),
        grid=(M // tm,),
        in_specs=[pl.BlockSpec((tm, NP), lambda i: (i, 0)),
                  pl.BlockSpec((tm, 1), lambda i: (i, 0))],
        out_specs=pl.BlockSpec((1, NP), lambda i: (0, 0)),
        # accumulator output stays resident across the grid -> axis must be arbitrary
        compiler_params=pltpu.CompilerParams(dimension_semantics=("arbitrary",)),
    )(logits_pad, labels_f)


# ---------------------------- parameters ----------------------------

def init_params(key):
    keys = iter(jax.random.split(key, 64))

    def w(shape, dtype=jnp.bfloat16):
        return (INIT_RANGE * jax.random.normal(next(keys), shape, jnp.float32)).astype(dtype)

    def zeros(n):
        return jnp.zeros((1, n), jnp.float32)

    def ones(n):
        return jnp.ones((1, n), jnp.float32)

    cls_w = w((HIDDEN, NUM_LABELS), jnp.float32)
    cls_w_pad = jnp.zeros((HIDDEN, LOGIT_PAD), jnp.float32
                          ).at[:, :NUM_LABELS].set(cls_w).astype(jnp.bfloat16)
    cls_b_pad = jnp.zeros((1, LOGIT_PAD), jnp.float32)

    params = {
        "word_emb": w((VOCAB, HIDDEN), jnp.float32),
        "pos_emb": w((MAX_POS, HIDDEN), jnp.float32),
        "type_emb": w((2, HIDDEN), jnp.float32),
        "emb_ln_g": ones(HIDDEN),
        "emb_ln_b": zeros(HIDDEN),
        "layers": [],
        "pooler_w": w((HIDDEN, HIDDEN)),
        "pooler_b": zeros(HIDDEN),
        "cls_w_pad": cls_w_pad,
        "cls_b_pad": cls_b_pad,
    }
    for _ in range(NUM_LAYERS):
        params["layers"].append({
            "qkv_w": w((HIDDEN, 3 * HIDDEN)),        # fused Q | K | V
            "qkv_b": zeros(3 * HIDDEN),
            "o_w": w((HIDDEN, HIDDEN)), "o_b": zeros(HIDDEN),
            "attn_ln_g": ones(HIDDEN), "attn_ln_b": zeros(HIDDEN),
            "i_w": w((HIDDEN, INTERMEDIATE)), "i_b": zeros(INTERMEDIATE),
            "f_w": w((INTERMEDIATE, HIDDEN)), "f_b": zeros(HIDDEN),
            "ffn_ln_g": ones(HIDDEN), "ffn_ln_b": zeros(HIDDEN),
        })
    return params


# ---------------------------- forward pass ----------------------------

def bert_forward(params, input_ids, labels, input_mask):
    B, S = input_ids.shape
    M = B * S
    assert M % 8 == 0

    # --- embeddings: gathers are JAX glue; sum + LayerNorm fused in one kernel ---
    tok = jnp.take(params["word_emb"], input_ids.reshape(-1), axis=0)      # (M, H) f32
    pos = jnp.take(params["pos_emb"], jnp.tile(jnp.arange(S), B), axis=0)  # (M, H) f32
    x = embed_layernorm(tok, pos, params["type_emb"][0:1],
                        params["emb_ln_g"], params["emb_ln_b"])            # (M, H) bf16

    # additive attention mask, one row per batch: (B, 1, S)
    add_mask = ((1.0 - input_mask.astype(jnp.float32)) * (-1e9)).reshape(B, 1, S)

    # --- transformer encoder layers (2 fused kernels per layer) ---
    for lyr in params["layers"]:
        x = attention_block(x.reshape(B, S, HIDDEN), add_mask, lyr).reshape(M, HIDDEN)
        x = ffn_block(x, lyr["i_w"], lyr["i_b"], lyr["f_w"], lyr["f_b"],
                      lyr["ffn_ln_g"], lyr["ffn_ln_b"])

    # --- pooler (dense+tanh on every token, per the reference) + classifier ---
    logits_pad = pool_classify(x, params["pooler_w"], params["pooler_b"],
                               params["cls_w_pad"], params["cls_b_pad"])   # (M, 128) f32

    # --- cross-entropy over span (label==1) and zero (label==0) positions ---
    labels_f = labels.reshape(M, 1).astype(jnp.float32)
    stats = ce_loss_stats(logits_pad, labels_f)                            # (1, 128)
    # NaN if a class is absent, matching nn.CrossEntropyLoss over an empty selection.
    span_loss = stats[0, 0] / stats[0, 1]
    zero_loss = stats[0, 2] / stats[0, 3]

    span_pos = labels.reshape(-1) == 1
    zero_pos = labels.reshape(-1) == 0
    # TODO(synk): span_logits / zero_logits in PyTorch are boolean-mask gathers with
    # data-dependent shapes; we return the full logits plus the boolean masks instead.
    logits = logits_pad[:, :NUM_LABELS].reshape(B, S, NUM_LABELS)
    return span_loss, zero_loss, span_pos, zero_pos, logits


# ---------------------------- driver ----------------------------

if __name__ == "__main__":
    B, S = 2, 8
    key = jax.random.PRNGKey(0)
    kp, kid, klab = jax.random.split(key, 3)

    params = init_params(kp)
    input_ids = jax.random.randint(kid, (B, S), 0, VOCAB, dtype=jnp.int32)
    labels = jax.random.randint(klab, (B, S), 0, 2, dtype=jnp.int32)
    # guarantee both classes appear (CrossEntropyLoss over non-empty selections)
    labels = labels.at[0, 0].set(1).at[0, 1].set(0)
    input_mask = jnp.ones((B, S), jnp.int32)

    fwd = jax.jit(bert_forward)
    span_loss, zero_loss, span_pos, zero_pos, logits = fwd(params, input_ids, labels, input_mask)
    jax.block_until_ready((span_loss, zero_loss, logits))
    print("KERNEL_OK")
</pallas_src>

<mosaic_0001>
module attributes {stable_mosaic.version = 11 : i64} {
  func.func @_pool_cls_kernel(%arg0: i32, %arg1: memref<16x128xbf16, #tpu.memory_space<vmem>>, %arg2: memref<128x128xbf16, #tpu.memory_space<vmem>>, %arg3: memref<1x128xf32, #tpu.memory_space<vmem>>, %arg4: memref<128x128xbf16, #tpu.memory_space<vmem>>, %arg5: memref<1x128xf32, #tpu.memory_space<vmem>>, %arg6: memref<16x128xf32, #tpu.memory_space<vmem>>) attributes {dimension_semantics = [#tpu.dimension_semantics<parallel>], iteration_bounds = array<i64: 1>, scalar_prefetch = 0 : i64, scratch_operands = 0 : i64, tpu.core_type = #tpu.core_type<tc>, window_params = [{transform_indices = @transform_0, window_bounds = array<i64: 16, 128>}, {pipeline_mode = #tpu.pipeline_mode<synchronous>, transform_indices = @transform_1, window_bounds = array<i64: 128, 128>}, {pipeline_mode = #tpu.pipeline_mode<synchronous>, transform_indices = @transform_2, window_bounds = array<i64: 1, 128>}, {pipeline_mode = #tpu.pipeline_mode<synchronous>, transform_indices = @transform_3, window_bounds = array<i64: 128, 128>}, {pipeline_mode = #tpu.pipeline_mode<synchronous>, transform_indices = @transform_4, window_bounds = array<i64: 1, 128>}, {transform_indices = @transform_5, window_bounds = array<i64: 16, 128>}]} {
    %c0 = arith.constant 0 : index
    %c0_0 = arith.constant 0 : index
    %0 = vector.load %arg1[%c0, %c0_0] : memref<16x128xbf16, #tpu.memory_space<vmem>>, vector<16x128xbf16>
    %c0_1 = arith.constant 0 : index
    %c0_2 = arith.constant 0 : index
    %1 = vector.load %arg2[%c0_1, %c0_2] : memref<128x128xbf16, #tpu.memory_space<vmem>>, vector<128x128xbf16>
    %cst = arith.constant dense<0.000000e+00> : vector<16x128xf32>
    %2 = tpu.matmul %0, %1, %cst {dimension_numbers = #tpu.dot_dimension_numbers<[1], [0], [0], [1], [0, 0, 1, 1], [], []>} : vector<16x128xbf16>, vector<128x128xbf16>, vector<16x128xf32> -> vector<16x128xf32>
    %c0_3 = arith.constant 0 : index
    %c0_4 = arith.constant 0 : index
    %3 = vector.load %arg3[%c0_3, %c0_4] : memref<1x128xf32, #tpu.memory_space<vmem>>, vector<1x128xf32>
    %4 = vector.broadcast %3 : vector<1x128xf32> to vector<16x128xf32>
    %5 = arith.addf %2, %4 : vector<16x128xf32>
    %6 = math.tanh %5 : vector<16x128xf32>
    %7 = arith.truncf %6 : vector<16x128xf32> to vector<16x128xbf16>
    %c0_5 = arith.constant 0 : index
    %c0_6 = arith.constant 0 : index
    %8 = vector.load %arg4[%c0_5, %c0_6] : memref<128x128xbf16, #tpu.memory_space<vmem>>, vector<128x128xbf16>
    %cst_7 = arith.constant dense<0.000000e+00> : vector<16x128xf32>
    %9 = tpu.matmul %7, %8, %cst_7 {dimension_numbers = #tpu.dot_dimension_numbers<[1], [0], [0], [1], [0, 0, 1, 1], [], []>} : vector<16x128xbf16>, vector<128x128xbf16>, vector<16x128xf32> -> vector<16x128xf32>
    %c0_8 = arith.constant 0 : index
    %c0_9 = arith.constant 0 : index
    %10 = vector.load %arg5[%c0_8, %c0_9] : memref<1x128xf32, #tpu.memory_space<vmem>>, vector<1x128xf32>
    %11 = vector.broadcast %10 : vector<1x128xf32> to vector<16x128xf32>
    %12 = arith.addf %9, %11 : vector<16x128xf32>
    %c0_10 = arith.constant 0 : index
    %c0_11 = arith.constant 0 : index
    %13 = vector.load %arg6[%c0_10, %c0_11] : memref<16x128xf32, #tpu.memory_space<vmem>>, vector<16x128xf32>
    tpu.vector_store %arg6[%c0_10, %c0_11], %12 {strides = array<i32>} : memref<16x128xf32, #tpu.memory_space<vmem>>, vector<16x128xf32>,
    return
  }
  func.func @transform_0(%arg0: i32) -> (i32, i32) {
    %c0_i32 = arith.constant 0 : i32
    %c0_i32_0 = arith.constant 0 : i32
    return %arg0, %c0_i32 : i32, i32
  }
  func.func @transform_1(%arg0: i32) -> (i32, i32) {
    %c0_i32 = arith.constant 0 : i32
    %c0_i32_0 = arith.constant 0 : i32
    %c0_i32_1 = arith.constant 0 : i32
    return %c0_i32, %c0_i32_0 : i32, i32
  }
  func.func @transform_2(%arg0: i32) -> (i32, i32) {
    %c0_i32 = arith.constant 0 : i32
    %c0_i32_0 = arith.constant 0 : i32
    %c0_i32_1 = arith.constant 0 : i32
    return %c0_i32, %c0_i32_0 : i32, i32
  }
  func.func @transform_3(%arg0: i32) -> (i32, i32) {
    %c0_i32 = arith.constant 0 : i32
    %c0_i32_0 = arith.constant 0 : i32
    %c0_i32_1 = arith.constant 0 : i32
    return %c0_i32, %c0_i32_0 : i32, i32
  }
  func.func @transform_4(%arg0: i32) -> (i32, i32) {
    %c0_i32 = arith.constant 0 : i32
    %c0_i32_0 = arith.constant 0 : i32
    %c0_i32_1 = arith.constant 0 : i32
    return %c0_i32, %c0_i32_0 : i32, i32
  }
  func.func @transform_5(%arg0: i32) -> (i32, i32) {
    %c0_i32 = arith.constant 0 : i32
    %c0_i32_0 = arith.constant 0 : i32
    return %arg0, %c0_i32 : i32, i32
  }
}

module attributes {stable_mosaic.version = 11 : i64} {
  func.func @_emb_ln_kernel(%arg0: i32, %arg1: memref<16x128xf32, #tpu.memory_space<vmem>>, %arg2: memref<16x128xf32, #tpu.memory_space<vmem>>, %arg3: memref<1x128xf32, #tpu.memory_space<vmem>>, %arg4: memref<1x128xf32, #tpu.memory_space<vmem>>, %arg5: memref<1x128xf32, #tpu.memory_space<vmem>>, %arg6: memref<16x128xbf16, #tpu.memory_space<vmem>>) attributes {dimension_semantics = [#tpu.dimension_semantics<parallel>], iteration_bounds = array<i64: 1>, scalar_prefetch = 0 : i64, scratch_operands = 0 : i64, tpu.core_type = #tpu.core_type<tc>, window_params = [{transform_indices = @transform_0, window_bounds = array<i64: 16, 128>}, {transform_indices = @transform_1, window_bounds = array<i64: 16, 128>}, {pipeline_mode = #tpu.pipeline_mode<synchronous>, transform_indices = @transform_2, window_bounds = array<i64: 1, 128>}, {pipeline_mode = #tpu.pipeline_mode<synchronous>, transform_indices = @transform_3, window_bounds = array<i64: 1, 128>}, {pipeline_mode = #tpu.pipeline_mode<synchronous>, transform_indices = @transform_4, window_bounds = array<i64: 1, 128>}, {transform_indices = @transform_5, window_bounds = array<i64: 16, 128>}]} {
    %c0 = arith.constant 0 : index
    %c0_0 = arith.constant 0 : index
    %0 = vector.load %arg1[%c0, %c0_0] : memref<16x128xf32, #tpu.memory_space<vmem>>, vector<16x128xf32>
    %c0_1 = arith.constant 0 : index
    %c0_2 = arith.constant 0 : index
    %1 = vector.load %arg2[%c0_1, %c0_2] : memref<16x128xf32, #tpu.memory_space<vmem>>, vector<16x128xf32>
    %2 = arith.addf %0, %1 : vector<16x128xf32>
    %c0_3 = arith.constant 0 : index
    %c0_4 = arith.constant 0 : index
    %3 = vector.load %arg3[%c0_3, %c0_4] : memref<1x128xf32, #tpu.memory_space<vmem>>, vector<1x128xf32>
    %4 = vector.broadcast %3 : vector<1x128xf32> to vector<16x128xf32>
    %5 = arith.addf %2, %4 : vector<16x128xf32>
    %cst = arith.constant dense<0.000000e+00> : vector<16xf32>
    %6 = vector.multi_reduction <add>, %5, %cst [1] : vector<16x128xf32> to vector<16xf32>
    %7 = vector.shape_cast %6 : vector<16xf32> to vector<16x1xf32>
    %cst_5 = arith.constant 1.280000e+02 : f32
    %8 = vector.broadcast %cst_5 : f32 to vector<16x1xf32>
    %9 = arith.divf %7, %8 : vector<16x1xf32>
    %10 = vector.broadcast %9 : vector<16x1xf32> to vector<16x128xf32>
    %11 = arith.subf %5, %10 : vector<16x128xf32>
    %12 = arith.mulf %11, %11 : vector<16x128xf32>
    %cst_6 = arith.constant dense<0.000000e+00> : vector<16xf32>
    %13 = vector.multi_reduction <add>, %12, %cst_6 [1] : vector<16x128xf32> to vector<16xf32>
    %14 = vector.shape_cast %13 : vector<16xf32> to vector<16x1xf32>
    %cst_7 = arith.constant 1.280000e+02 : f32
    %15 = vector.broadcast %cst_7 : f32 to vector<16x1xf32>
    %16 = arith.divf %14, %15 : vector<16x1xf32>
    %17 = vector.broadcast %9 : vector<16x1xf32> to vector<16x128xf32>
    %18 = arith.subf %5, %17 : vector<16x128xf32>
    %cst_8 = arith.constant 9.99999996E-13 : f32
    %19 = vector.broadcast %cst_8 : f32 to vector<16x1xf32>
    %20 = arith.addf %16, %19 : vector<16x1xf32>
    %21 = math.rsqrt %20 : vector<16x1xf32>
    %22 = vector.broadcast %21 : vector<16x1xf32> to vector<16x128xf32>
    %23 = arith.mulf %18, %22 : vector<16x128xf32>
    %c0_9 = arith.constant 0 : index
    %c0_10 = arith.constant 0 : index
    %24 = vector.load %arg4[%c0_9, %c0_10] : memref<1x128xf32, #tpu.memory_space<vmem>>, vector<1x128xf32>
    %25 = vector.broadcast %24 : vector<1x128xf32> to vector<16x128xf32>
    %26 = arith.mulf %23, %25 : vector<16x128xf32>
    %c0_11 = arith.constant 0 : index
    %c0_12 = arith.constant 0 : index
    %27 = vector.load %arg5[%c0_11, %c0_12] : memref<1x128xf32, #tpu.memory_space<vmem>>, vector<1x128xf32>
    %28 = vector.broadcast %27 : vector<1x128xf32> to vector<16x128xf32>
    %29 = arith.addf %26, %28 : vector<16x128xf32>
    %30 = arith.truncf %29 : vector<16x128xf32> to vector<16x128xbf16>
    %c0_13 = arith.constant 0 : index
    %c0_14 = arith.constant 0 : index
    %31 = vector.load %arg6[%c0_13, %c0_14] : memref<16x128xbf16, #tpu.memory_space<vmem>>, vector<16x128xbf16>
    tpu.vector_store %arg6[%c0_13, %c0_14], %30 {strides = array<i32>} : memref<16x128xbf16, #tpu.memory_space<vmem>>, vector<16x128xbf16>,
    return
  }
  func.func @transform_0(%arg0: i32) -> (i32, i32) {
    %c0_i32 = arith.constant 0 : i32
    %c0_i32_0 = arith.constant 0 : i32
    return %arg0, %c0_i32 : i32, i32
  }
  func.func @transform_1(%arg0: i32) -> (i32, i32) {
    %c0_i32 = arith.constant 0 : i32
    %c0_i32_0 = arith.constant 0 : i32
    return %arg0, %c0_i32 : i32, i32
  }
  func.func @transform_2(%arg0: i32) -> (i32, i32) {
    %c0_i32 = arith.constant 0 : i32
    %c0_i32_0 = arith.constant 0 : i32
    %c0_i32_1 = arith.constant 0 : i32
    return %c0_i32, %c0_i32_0 : i32, i32
  }
  func.func @transform_3(%arg0: i32) -> (i32, i32) {
    %c0_i32 = arith.constant 0 : i32
    %c0_i32_0 = arith.constant 0 : i32
    %c0_i32_1 = arith.constant 0 : i32
    return %c0_i32, %c0_i32_0 : i32, i32
  }
  func.func @transform_4(%arg0: i32) -> (i32, i32) {
    %c0_i32 = arith.constant 0 : i32
    %c0_i32_0 = arith.constant 0 : i32
    %c0_i32_1 = arith.constant 0 : i32
    return %c0_i32, %c0_i32_0 : i32, i32
  }
  func.func @transform_5(%arg0: i32) -> (i32, i32) {
    %c0_i32 = arith.constant 0 : i32
    %c0_i32_0 = arith.constant 0 : i32
    return %arg0, %c0_i32 : i32, i32
  }
}

module attributes {stable_mosaic.version = 11 : i64} {
  func.func @_ffn_kernel(%arg0: i32, %arg1: memref<16x128xbf16, #tpu.memory_space<vmem>>, %arg2: memref<128x256xbf16, #tpu.memory_space<vmem>>, %arg3: memref<1x256xf32, #tpu.memory_space<vmem>>, %arg4: memref<256x128xbf16, #tpu.memory_space<vmem>>, %arg5: memref<1x128xf32, #tpu.memory_space<vmem>>, %arg6: memref<1x128xf32, #tpu.memory_space<vmem>>, %arg7: memref<1x128xf32, #tpu.memory_space<vmem>>, %arg8: memref<16x128xbf16, #tpu.memory_space<vmem>>) attributes {dimension_semantics = [#tpu.dimension_semantics<parallel>], iteration_bounds = array<i64: 1>, scalar_prefetch = 0 : i64, scratch_operands = 0 : i64, tpu.core_type = #tpu.core_type<tc>, window_params = [{transform_indices = @transform_0, window_bounds = array<i64: 16, 128>}, {pipeline_mode = #tpu.pipeline_mode<synchronous>, transform_indices = @transform_1, window_bounds = array<i64: 128, 256>}, {pipeline_mode = #tpu.pipeline_mode<synchronous>, transform_indices = @transform_2, window_bounds = array<i64: 1, 256>}, {pipeline_mode = #tpu.pipeline_mode<synchronous>, transform_indices = @transform_3, window_bounds = array<i64: 256, 128>}, {pipeline_mode = #tpu.pipeline_mode<synchronous>, transform_indices = @transform_4, window_bounds = array<i64: 1, 128>}, {pipeline_mode = #tpu.pipeline_mode<synchronous>, transform_indices = @transform_5, window_bounds = array<i64: 1, 128>}, {pipeline_mode = #tpu.pipeline_mode<synchronous>, transform_indices = @transform_6, window_bounds = array<i64: 1, 128>}, {transform_indices = @transform_7, window_bounds = array<i64: 16, 128>}]} {
    %c0 = arith.constant 0 : index
    %c0_0 = arith.constant 0 : index
    %0 = vector.load %arg1[%c0, %c0_0] : memref<16x128xbf16, #tpu.memory_space<vmem>>, vector<16x128xbf16>
    %c0_1 = arith.constant 0 : index
    %c0_2 = arith.constant 0 : index
    %1 = vector.load %arg2[%c0_1, %c0_2] : memref<128x256xbf16, #tpu.memory_space<vmem>>, vector<128x256xbf16>
    %cst = arith.constant dense<0.000000e+00> : vector<16x256xf32>
    %2 = tpu.matmul %0, %1, %cst {dimension_numbers = #tpu.dot_dimension_numbers<[1], [0], [0], [1], [0, 0, 1, 1], [], []>} : vector<16x128xbf16>, vector<128x256xbf16>, vector<16x256xf32> -> vector<16x256xf32>
    %c0_3 = arith.constant 0 : index
    %c0_4 = arith.constant 0 : index
    %3 = vector.load %arg3[%c0_3, %c0_4] : memref<1x256xf32, #tpu.memory_space<vmem>>, vector<1x256xf32>
    %4 = vector.broadcast %3 : vector<1x256xf32> to vector<16x256xf32>
    %5 = arith.addf %2, %4 : vector<16x256xf32>
    %6 = arith.mulf %5, %5 : vector<16x256xf32>
    %7 = arith.mulf %5, %6 : vector<16x256xf32>
    %cst_5 = arith.constant 4.471500e-02 : f32
    %8 = vector.broadcast %cst_5 : f32 to vector<16x256xf32>
    %9 = arith.mulf %8, %7 : vector<16x256xf32>
    %10 = arith.addf %5, %9 : vector<16x256xf32>
    %cst_6 = arith.constant 0.797884583 : f32
    %11 = vector.broadcast %cst_6 : f32 to vector<16x256xf32>
    %12 = arith.mulf %11, %10 : vector<16x256xf32>
    %13 = math.tanh %12 : vector<16x256xf32>
    %cst_7 = arith.constant 1.000000e+00 : f32
    %14 = vector.broadcast %cst_7 : f32 to vector<16x256xf32>
    %15 = arith.addf %14, %13 : vector<16x256xf32>
    %cst_8 = arith.constant 5.000000e-01 : f32
    %16 = vector.broadcast %cst_8 : f32 to vector<16x256xf32>
    %17 = arith.mulf %16, %15 : vector<16x256xf32>
    %18 = arith.mulf %5, %17 : vector<16x256xf32>
    %19 = arith.truncf %18 : vector<16x256xf32> to vector<16x256xbf16>
    %c0_9 = arith.constant 0 : index
    %c0_10 = arith.constant 0 : index
    %20 = vector.load %arg4[%c0_9, %c0_10] : memref<256x128xbf16, #tpu.memory_space<vmem>>, vector<256x128xbf16>
    %cst_11 = arith.constant dense<0.000000e+00> : vector<16x128xf32>
    %21 = tpu.matmul %19, %20, %cst_11 {dimension_numbers = #tpu.dot_dimension_numbers<[1], [0], [0], [1], [0, 0, 1, 1], [], []>} : vector<16x256xbf16>, vector<256x128xbf16>, vector<16x128xf32> -> vector<16x128xf32>
    %c0_12 = arith.constant 0 : index
    %c0_13 = arith.constant 0 : index
    %22 = vector.load %arg5[%c0_12, %c0_13] : memref<1x128xf32, #tpu.memory_space<vmem>>, vector<1x128xf32>
    %23 = vector.broadcast %22 : vector<1x128xf32> to vector<16x128xf32>
    %24 = arith.addf %21, %23 : vector<16x128xf32>
    %25 = arith.extf %0 : vector<16x128xbf16> to vector<16x128xf32>
    %26 = arith.addf %24, %25 : vector<16x128xf32>
    %cst_14 = arith.constant dense<0.000000e+00> : vector<16xf32>
    %27 = vector.multi_reduction <add>, %26, %cst_14 [1] : vector<16x128xf32> to vector<16xf32>
    %28 = vector.shape_cast %27 : vector<16xf32> to vector<16x1xf32>
    %cst_15 = arith.constant 1.280000e+02 : f32
    %29 = vector.broadcast %cst_15 : f32 to vector<16x1xf32>
    %30 = arith.divf %28, %29 : vector<16x1xf32>
    %31 = vector.broadcast %30 : vector<16x1xf32> to vector<16x128xf32>
    %32 = arith.subf %26, %31 : vector<16x128xf32>
    %33 = arith.mulf %32, %32 : vector<16x128xf32>
    %cst_16 = arith.constant dense<0.000000e+00> : vector<16xf32>
    %34 = vector.multi_reduction <add>, %33, %cst_16 [1] : vector<16x128xf32> to vector<16xf32>
    %35 = vector.shape_cast %34 : vector<16xf32> to vector<16x1xf32>
    %cst_17 = arith.constant 1.280000e+02 : f32
    %36 = vector.broadcast %cst_17 : f32 to vector<16x1xf32>
    %37 = arith.divf %35, %36 : vector<16x1xf32>
    %38 = vector.broadcast %30 : vector<16x1xf32> to vector<16x128xf32>
    %39 = arith.subf %26, %38 : vector<16x128xf32>
    %cst_18 = arith.constant 9.99999996E-13 : f32
    %40 = vector.broadcast %cst_18 : f32 to vector<16x1xf32>
    %41 = arith.addf %37, %40 : vector<16x1xf32>
    %42 = math.rsqrt %41 : vector<16x1xf32>
    %43 = vector.broadcast %42 : vector<16x1xf32> to vector<16x128xf32>
    %44 = arith.mulf %39, %43 : vector<16x128xf32>
    %c0_19 = arith.constant 0 : index
    %c0_20 = arith.constant 0 : index
    %45 = vector.load %arg6[%c0_19, %c0_20] : memref<1x128xf32, #tpu.memory_space<vmem>>, vector<1x128xf32>
    %46 = vector.broadcast %45 : vector<1x128xf32> to vector<16x128xf32>
    %47 = arith.mulf %44, %46 : vector<16x128xf32>
    %c0_21 = arith.constant 0 : index
    %c0_22 = arith.constant 0 : index
    %48 = vector.load %arg7[%c0_21, %c0_22] : memref<1x128xf32, #tpu.memory_space<vmem>>, vector<1x128xf32>
    %49 = vector.broadcast %48 : vector<1x128xf32> to vector<16x128xf32>
    %50 = arith.addf %47, %49 : vector<16x128xf32>
    %51 = arith.truncf %50 : vector<16x128xf32> to vector<16x128xbf16>
    %c0_23 = arith.constant 0 : index
    %c0_24 = arith.constant 0 : index
    %52 = vector.load %arg8[%c0_23, %c0_24] : memref<16x128xbf16, #tpu.memory_space<vmem>>, vector<16x128xbf16>
    tpu.vector_store %arg8[%c0_23, %c0_24], %51 {strides = array<i32>} : memref<16x128xbf16, #tpu.memory_space<vmem>>, vector<16x128xbf16>,
    return
  }
  func.func @transform_0(%arg0: i32) -> (i32, i32) {
    %c0_i32 = arith.constant 0 : i32
    %c0_i32_0 = arith.constant 0 : i32
    return %arg0, %c0_i32 : i32, i32
  }
  func.func @transform_1(%arg0: i32) -> (i32, i32) {
    %c0_i32 = arith.constant 0 : i32
    %c0_i32_0 = arith.constant 0 : i32
    %c0_i32_1 = arith.constant 0 : i32
    return %c0_i32, %c0_i32_0 : i32, i32
  }
  func.func @transform_2(%arg0: i32) -> (i32, i32) {
    %c0_i32 = arith.constant 0 : i32
    %c0_i32_0 = arith.constant 0 : i32
    %c0_i32_1 = arith.constant 0 : i32
    return %c0_i32, %c0_i32_0 : i32, i32
  }
  func.func @transform_3(%arg0: i32) -> (i32, i32) {
    %c0_i32 = arith.constant 0 : i32
    %c0_i32_0 = arith.constant 0 : i32
    %c0_i32_1 = arith.constant 0 : i32
    return %c0_i32, %c0_i32_0 : i32, i32
  }
  func.func @transform_4(%arg0: i32) -> (i32, i32) {
    %c0_i32 = arith.constant 0 : i32
    %c0_i32_0 = arith.constant 0 : i32
    %c0_i32_1 = arith.constant 0 : i32
    return %c0_i32, %c0_i32_0 : i32, i32
  }
  func.func @transform_5(%arg0: i32) -> (i32, i32) {
    %c0_i32 = arith.constant 0 : i32
    %c0_i32_0 = arith.constant 0 : i32
    %c0_i32_1 = arith.constant 0 : i32
    return %c0_i32, %c0_i32_0 : i32, i32
  }
  func.func @transform_6(%arg0: i32) -> (i32, i32) {
    %c0_i32 = arith.constant 0 : i32
    %c0_i32_0 = arith.constant 0 : i32
    %c0_i32_1 = arith.constant 0 : i32
    return %c0_i32, %c0_i32_0 : i32, i32
  }
  func.func @transform_7(%arg0: i32) -> (i32, i32) {
    %c0_i32 = arith.constant 0 : i32
    %c0_i32_0 = arith.constant 0 : i32
    return %arg0, %c0_i32 : i32, i32
  }
}

module attributes {stable_mosaic.version = 11 : i64} {
  func.func @_attn_block_kernel(%arg0: i32, %arg1: memref<1x8x128xbf16, #tpu.memory_space<vmem>>, %arg2: memref<1x1x8xf32, #tpu.memory_space<vmem>>, %arg3: memref<128x384xbf16, #tpu.memory_space<vmem>>, %arg4: memref<1x384xf32, #tpu.memory_space<vmem>>, %arg5: memref<128x128xbf16, #tpu.memory_space<vmem>>, %arg6: memref<1x128xf32, #tpu.memory_space<vmem>>, %arg7: memref<1x128xf32, #tpu.memory_space<vmem>>, %arg8: memref<1x128xf32, #tpu.memory_space<vmem>>, %arg9: memref<1x8x128xbf16, #tpu.memory_space<vmem>>) attributes {dimension_semantics = [#tpu.dimension_semantics<parallel>], iteration_bounds = array<i64: 2>, scalar_prefetch = 0 : i64, scratch_operands = 0 : i64, tpu.core_type = #tpu.core_type<tc>, window_params = [{transform_indices = @transform_0, window_bounds = array<i64: 1, 8, 128>}, {transform_indices = @transform_1, window_bounds = array<i64: 1, 1, 8>}, {pipeline_mode = #tpu.pipeline_mode<synchronous>, transform_indices = @transform_2, window_bounds = array<i64: 128, 384>}, {pipeline_mode = #tpu.pipeline_mode<synchronous>, transform_indices = @transform_3, window_bounds = array<i64: 1, 384>}, {pipeline_mode = #tpu.pipeline_mode<synchronous>, transform_indices = @transform_4, window_bounds = array<i64: 128, 128>}, {pipeline_mode = #tpu.pipeline_mode<synchronous>, transform_indices = @transform_5, window_bounds = array<i64: 1, 128>}, {pipeline_mode = #tpu.pipeline_mode<synchronous>, transform_indices = @transform_6, window_bounds = array<i64: 1, 128>}, {pipeline_mode = #tpu.pipeline_mode<synchronous>, transform_indices = @transform_7, window_bounds = array<i64: 1, 128>}, {transform_indices = @transform_8, window_bounds = array<i64: 1, 8, 128>}]} {
    %c0 = arith.constant 0 : index
    %c0_0 = arith.constant 0 : index
    %c0_1 = arith.constant 0 : index
    %0 = vector.load %arg1[%c0, %c0_0, %c0_1] : memref<1x8x128xbf16, #tpu.memory_space<vmem>>, vector<1x8x128xbf16>
    %1 = vector.shape_cast %0 : vector<1x8x128xbf16> to vector<8x128xbf16>
    %c0_2 = arith.constant 0 : index
    %c0_3 = arith.constant 0 : index
    %2 = vector.load %arg3[%c0_2, %c0_3] : memref<128x384xbf16, #tpu.memory_space<vmem>>, vector<128x384xbf16>
    %cst = arith.constant dense<0.000000e+00> : vector<8x384xf32>
    %3 = tpu.matmul %1, %2, %cst {dimension_numbers = #tpu.dot_dimension_numbers<[1], [0], [0], [1], [0, 0, 1, 1], [], []>} : vector<8x128xbf16>, vector<128x384xbf16>, vector<8x384xf32> -> vector<8x384xf32>
    %c0_4 = arith.constant 0 : index
    %c0_5 = arith.constant 0 : index
    %4 = vector.load %arg4[%c0_4, %c0_5] : memref<1x384xf32, #tpu.memory_space<vmem>>, vector<1x384xf32>
    %5 = vector.broadcast %4 : vector<1x384xf32> to vector<8x384xf32>
    %6 = arith.addf %3, %5 : vector<8x384xf32>
    %c0_6 = arith.constant 0 : index
    %c0_7 = arith.constant 0 : index
    %c0_8 = arith.constant 0 : index
    %7 = vector.load %arg2[%c0_6, %c0_7, %c0_8] : memref<1x1x8xf32, #tpu.memory_space<vmem>>, vector<1x1x8xf32>
    %8 = vector.shape_cast %7 : vector<1x1x8xf32> to vector<1x8xf32>
    %9 = vector.shape_cast %8 : vector<1x8xf32> to vector<1x8xf32>
    %10 = vector.broadcast %9 : vector<1x8xf32> to vector<8x8xf32>
    %11 = vector.extract_strided_slice %6 {offsets = [0, 0], sizes = [8, 32], strides = [1, 1]} : vector<8x384xf32> to vector<8x32xf32>
    %12 = arith.truncf %11 : vector<8x32xf32> to vector<8x32xbf16>
    %13 = vector.extract_strided_slice %6 {offsets = [0, 128], sizes = [8, 32], strides = [1, 1]} : vector<8x384xf32> to vector<8x32xf32>
    %14 = arith.truncf %13 : vector<8x32xf32> to vector<8x32xbf16>
    %15 = vector.extract_strided_slice %6 {offsets = [0, 256], sizes = [8, 32], strides = [1, 1]} : vector<8x384xf32> to vector<8x32xf32>
    %16 = arith.truncf %15 : vector<8x32xf32> to vector<8x32xbf16>
    %cst_9 = arith.constant dense<0.000000e+00> : vector<8x8xf32>
    %17 = tpu.matmul %12, %14, %cst_9 {dimension_numbers = #tpu.dot_dimension_numbers<[1], [1], [0], [0], [0, 0, 1, 0], [], []>} : vector<8x32xbf16>, vector<8x32xbf16>, vector<8x8xf32> -> vector<8x8xf32>
    %cst_10 = arith.constant 0.176776692 : f32
    %18 = vector.broadcast %cst_10 : f32 to vector<8x8xf32>
    %19 = arith.mulf %17, %18 : vector<8x8xf32>
    %20 = arith.addf %19, %10 : vector<8x8xf32>
    %cst_11 = arith.constant dense<0xFF800000> : vector<8xf32>
    %21 = vector.multi_reduction <maximumf>, %20, %cst_11 [1] : vector<8x8xf32> to vector<8xf32>
    %22 = vector.shape_cast %21 : vector<8xf32> to vector<8x1xf32>
    %23 = vector.broadcast %22 : vector<8x1xf32> to vector<8x8xf32>
    %24 = arith.subf %20, %23 : vector<8x8xf32>
    %25 = math.exp %24 : vector<8x8xf32>
    %cst_12 = arith.constant dense<0.000000e+00> : vector<8xf32>
    %26 = vector.multi_reduction <add>, %25, %cst_12 [1] : vector<8x8xf32> to vector<8xf32>
    %27 = vector.shape_cast %26 : vector<8xf32> to vector<8x1xf32>
    %28 = tpu.reciprocal %27 {approx = true} : vector<8x1xf32> -> vector<8x1xf32>
    %29 = vector.broadcast %28 : vector<8x1xf32> to vector<8x8xf32>
    %30 = arith.mulf %25, %29 : vector<8x8xf32>
    %31 = arith.truncf %30 : vector<8x8xf32> to vector<8x8xbf16>
    %cst_13 = arith.constant dense<0.000000e+00> : vector<8x32xf32>
    %32 = tpu.matmul %31, %16, %cst_13 {dimension_numbers = #tpu.dot_dimension_numbers<[1], [0], [0], [1], [0, 0, 1, 1], [], []>} : vector<8x8xbf16>, vector<8x32xbf16>, vector<8x32xf32> -> vector<8x32xf32>
    %33 = vector.extract_strided_slice %6 {offsets = [0, 32], sizes = [8, 32], strides = [1, 1]} : vector<8x384xf32> to vector<8x32xf32>
    %34 = arith.truncf %33 : vector<8x32xf32> to vector<8x32xbf16>
    %35 = vector.extract_strided_slice %6 {offsets = [0, 160], sizes = [8, 32], strides = [1, 1]} : vector<8x384xf32> to vector<8x32xf32>
    %36 = arith.truncf %35 : vector<8x32xf32> to vector<8x32xbf16>
    %37 = vector.extract_strided_slice %6 {offsets = [0, 288], sizes = [8, 32], strides = [1, 1]} : vector<8x384xf32> to vector<8x32xf32>
    %38 = arith.truncf %37 : vector<8x32xf32> to vector<8x32xbf16>
    %cst_14 = arith.constant dense<0.000000e+00> : vector<8x8xf32>
    %39 = tpu.matmul %34, %36, %cst_14 {dimension_numbers = #tpu.dot_dimension_numbers<[1], [1], [0], [0], [0, 0, 1, 0], [], []>} : vector<8x32xbf16>, vector<8x32xbf16>, vector<8x8xf32> -> vector<8x8xf32>
    %cst_15 = arith.constant 0.176776692 : f32
    %40 = vector.broadcast %cst_15 : f32 to vector<8x8xf32>
    %41 = arith.mulf %39, %40 : vector<8x8xf32>
    %42 = arith.addf %41, %10 : vector<8x8xf32>
    %cst_16 = arith.constant dense<0xFF800000> : vector<8xf32>
    %43 = vector.multi_reduction <maximumf>, %42, %cst_16 [1] : vector<8x8xf32> to vector<8xf32>
    %44 = vector.shape_cast %43 : vector<8xf32> to vector<8x1xf32>
    %45 = vector.broadcast %44 : vector<8x1xf32> to vector<8x8xf32>
    %46 = arith.subf %42, %45 : vector<8x8xf32>
    %47 = math.exp %46 : vector<8x8xf32>
    %cst_17 = arith.constant dense<0.000000e+00> : vector<8xf32>
    %48 = vector.multi_reduction <add>, %47, %cst_17 [1] : vector<8x8xf32> to vector<8xf32>
    %49 = vector.shape_cast %48 : vector<8xf32> to vector<8x1xf32>
    %50 = tpu.reciprocal %49 {approx = true} : vector<8x1xf32> -> vector<8x1xf32>
    %51 = vector.broadcast %50 : vector<8x1xf32> to vector<8x8xf32>
    %52 = arith.mulf %47, %51 : vector<8x8xf32>
    %53 = arith.truncf %52 : vector<8x8xf32> to vector<8x8xbf16>
    %cst_18 = arith.constant dense<0.000000e+00> : vector<8x32xf32>
    %54 = tpu.matmul %53, %38, %cst_18 {dimension_numbers = #tpu.dot_dimension_numbers<[1], [0], [0], [1], [0, 0, 1, 1], [], []>} : vector<8x8xbf16>, vector<8x32xbf16>, vector<8x32xf32> -> vector<8x32xf32>
    %55 = vector.extract_strided_slice %6 {offsets = [0, 64], sizes = [8, 32], strides = [1, 1]} : vector<8x384xf32> to vector<8x32xf32>
    %56 = arith.truncf %55 : vector<8x32xf32> to vector<8x32xbf16>
    %57 = vector.extract_strided_slice %6 {offsets = [0, 192], sizes = [8, 32], strides = [1, 1]} : vector<8x384xf32> to vector<8x32xf32>
    %58 = arith.truncf %57 : vector<8x32xf32> to vector<8x32xbf16>
    %59 = vector.extract_strided_slice %6 {offsets = [0, 320], sizes = [8, 32], strides = [1, 1]} : vector<8x384xf32> to vector<8x32xf32>
    %60 = arith.truncf %59 : vector<8x32xf32> to vector<8x32xbf16>
    %cst_19 = arith.constant dense<0.000000e+00> : vector<8x8xf32>
    %61 = tpu.matmul %56, %58, %cst_19 {dimension_numbers = #tpu.dot_dimension_numbers<[1], [1], [0], [0], [0, 0, 1, 0], [], []>} : vector<8x32xbf16>, vector<8x32xbf16>, vector<8x8xf32> -> vector<8x8xf32>
    %cst_20 = arith.constant 0.176776692 : f32
    %62 = vector.broadcast %cst_20 : f32 to vector<8x8xf32>
    %63 = arith.mulf %61, %62 : vector<8x8xf32>
    %64 = arith.addf %63, %10 : vector<8x8xf32>
    %cst_21 = arith.constant dense<0xFF800000> : vector<8xf32>
    %65 = vector.multi_reduction <maximumf>, %64, %cst_21 [1] : vector<8x8xf32> to vector<8xf32>
    %66 = vector.shape_cast %65 : vector<8xf32> to vector<8x1xf32>
    %67 = vector.broadcast %66 : vector<8x1xf32> to vector<8x8xf32>
    %68 = arith.subf %64, %67 : vector<8x8xf32>
    %69 = math.exp %68 : vector<8x8xf32>
    %cst_22 = arith.constant dense<0.000000e+00> : vector<8xf32>
    %70 = vector.multi_reduction <add>, %69, %cst_22 [1] : vector<8x8xf32> to vector<8xf32>
    %71 = vector.shape_cast %70 : vector<8xf32> to vector<8x1xf32>
    %72 = tpu.reciprocal %71 {approx = true} : vector<8x1xf32> -> vector<8x1xf32>
    %73 = vector.broadcast %72 : vector<8x1xf32> to vector<8x8xf32>
    %74 = arith.mulf %69, %73 : vector<8x8xf32>
    %75 = arith.truncf %74 : vector<8x8xf32> to vector<8x8xbf16>
    %cst_23 = arith.constant dense<0.000000e+00> : vector<8x32xf32>
    %76 = tpu.matmul %75, %60, %cst_23 {dimension_numbers = #tpu.dot_dimension_numbers<[1], [0], [0], [1], [0, 0, 1, 1], [], []>} : vector<8x8xbf16>, vector<8x32xbf16>, vector<8x32xf32> -> vector<8x32xf32>
    %77 = vector.extract_strided_slice %6 {offsets = [0, 96], sizes = [8, 32], strides = [1, 1]} : vector<8x384xf32> to vector<8x32xf32>
    %78 = arith.truncf %77 : vector<8x32xf32> to vector<8x32xbf16>
    %79 = vector.extract_strided_slice %6 {offsets = [0, 224], sizes = [8, 32], strides = [1, 1]} : vector<8x384xf32> to vector<8x32xf32>
    %80 = arith.truncf %79 : vector<8x32xf32> to vector<8x32xbf16>
    %81 = vector.extract_strided_slice %6 {offsets = [0, 352], sizes = [8, 32], strides = [1, 1]} : vector<8x384xf32> to vector<8x32xf32>
    %82 = arith.truncf %81 : vector<8x32xf32> to vector<8x32xbf16>
    %cst_24 = arith.constant dense<0.000000e+00> : vector<8x8xf32>
    %83 = tpu.matmul %78, %80, %cst_24 {dimension_numbers = #tpu.dot_dimension_numbers<[1], [1], [0], [0], [0, 0, 1, 0], [], []>} : vector<8x32xbf16>, vector<8x32xbf16>, vector<8x8xf32> -> vector<8x8xf32>
    %cst_25 = arith.constant 0.176776692 : f32
    %84 = vector.broadcast %cst_25 : f32 to vector<8x8xf32>
    %85 = arith.mulf %83, %84 : vector<8x8xf32>
    %86 = arith.addf %85, %10 : vector<8x8xf32>
    %cst_26 = arith.constant dense<0xFF800000> : vector<8xf32>
    %87 = vector.multi_reduction <maximumf>, %86, %cst_26 [1] : vector<8x8xf32> to vector<8xf32>
    %88 = vector.shape_cast %87 : vector<8xf32> to vector<8x1xf32>
    %89 = vector.broadcast %88 : vector<8x1xf32> to vector<8x8xf32>
    %90 = arith.subf %86, %89 : vector<8x8xf32>
    %91 = math.exp %90 : vector<8x8xf32>
    %cst_27 = arith.constant dense<0.000000e+00> : vector<8xf32>
    %92 = vector.multi_reduction <add>, %91, %cst_27 [1] : vector<8x8xf32> to vector<8xf32>
    %93 = vector.shape_cast %92 : vector<8xf32> to vector<8x1xf32>
    %94 = tpu.reciprocal %93 {approx = true} : vector<8x1xf32> -> vector<8x1xf32>
    %95 = vector.broadcast %94 : vector<8x1xf32> to vector<8x8xf32>
    %96 = arith.mulf %91, %95 : vector<8x8xf32>
    %97 = arith.truncf %96 : vector<8x8xf32> to vector<8x8xbf16>
    %cst_28 = arith.constant dense<0.000000e+00> : vector<8x32xf32>
    %98 = tpu.matmul %97, %82, %cst_28 {dimension_numbers = #tpu.dot_dimension_numbers<[1], [0], [0], [1], [0, 0, 1, 1], [], []>} : vector<8x8xbf16>, vector<8x32xbf16>, vector<8x32xf32> -> vector<8x32xf32>
    %99 = tpu.concatenate %32, %54, %76, %98 in 1 : vector<8x32xf32>, vector<8x32xf32>, vector<8x32xf32>, vector<8x32xf32> -> vector<8x128xf32>
    %100 = arith.truncf %99 : vector<8x128xf32> to vector<8x128xbf16>
    %c0_29 = arith.constant 0 : index
    %c0_30 = arith.constant 0 : index
    %101 = vector.load %arg5[%c0_29, %c0_30] : memref<128x128xbf16, #tpu.memory_space<vmem>>, vector<128x128xbf16>
    %cst_31 = arith.constant dense<0.000000e+00> : vector<8x128xf32>
    %102 = tpu.matmul %100, %101, %cst_31 {dimension_numbers = #tpu.dot_dimension_numbers<[1], [0], [0], [1], [0, 0, 1, 1], [], []>} : vector<8x128xbf16>, vector<128x128xbf16>, vector<8x128xf32> -> vector<8x128xf32>
    %c0_32 = arith.constant 0 : index
    %c0_33 = arith.constant 0 : index
    %103 = vector.load %arg6[%c0_32, %c0_33] : memref<1x128xf32, #tpu.memory_space<vmem>>, vector<1x128xf32>
    %104 = vector.broadcast %103 : vector<1x128xf32> to vector<8x128xf32>
    %105 = arith.addf %102, %104 : vector<8x128xf32>
    %106 = arith.extf %1 : vector<8x128xbf16> to vector<8x128xf32>
    %107 = arith.addf %105, %106 : vector<8x128xf32>
    %cst_34 = arith.constant dense<0.000000e+00> : vector<8xf32>
    %108 = vector.multi_reduction <add>, %107, %cst_34 [1] : vector<8x128xf32> to vector<8xf32>
    %109 = vector.shape_cast %108 : vector<8xf32> to vector<8x1xf32>
    %cst_35 = arith.constant 1.280000e+02 : f32
    %110 = vector.broadcast %cst_35 : f32 to vector<8x1xf32>
    %111 = arith.divf %109, %110 : vector<8x1xf32>
    %112 = vector.broadcast %111 : vector<8x1xf32> to vector<8x128xf32>
    %113 = arith.subf %107, %112 : vector<8x128xf32>
    %114 = arith.mulf %113, %113 : vector<8x128xf32>
    %cst_36 = arith.constant dense<0.000000e+00> : vector<8xf32>
    %115 = vector.multi_reduction <add>, %114, %cst_36 [1] : vector<8x128xf32> to vector<8xf32>
    %116 = vector.shape_cast %115 : vector<8xf32> to vector<8x1xf32>
    %cst_37 = arith.constant 1.280000e+02 : f32
    %117 = vector.broadcast %cst_37 : f32 to vector<8x1xf32>
    %118 = arith.divf %116, %117 : vector<8x1xf32>
    %119 = vector.broadcast %111 : vector<8x1xf32> to vector<8x128xf32>
    %120 = arith.subf %107, %119 : vector<8x128xf32>
    %cst_38 = arith.constant 9.99999996E-13 : f32
    %121 = vector.broadcast %cst_38 : f32 to vector<8x1xf32>
    %122 = arith.addf %118, %121 : vector<8x1xf32>
    %123 = math.rsqrt %122 : vector<8x1xf32>
    %124 = vector.broadcast %123 : vector<8x1xf32> to vector<8x128xf32>
    %125 = arith.mulf %120, %124 : vector<8x128xf32>
    %c0_39 = arith.constant 0 : index
    %c0_40 = arith.constant 0 : index
    %126 = vector.load %arg7[%c0_39, %c0_40] : memref<1x128xf32, #tpu.memory_space<vmem>>, vector<1x128xf32>
    %127 = vector.broadcast %126 : vector<1x128xf32> to vector<8x128xf32>
    %128 = arith.mulf %125, %127 : vector<8x128xf32>
    %c0_41 = arith.constant 0 : index
    %c0_42 = arith.constant 0 : index
    %129 = vector.load %arg8[%c0_41, %c0_42] : memref<1x128xf32, #tpu.memory_space<vmem>>, vector<1x128xf32>
    %130 = vector.broadcast %129 : vector<1x128xf32> to vector<8x128xf32>
    %131 = arith.addf %128, %130 : vector<8x128xf32>
    %132 = arith.truncf %131 : vector<8x128xf32> to vector<8x128xbf16>
    %c0_43 = arith.constant 0 : index
    %c0_44 = arith.constant 0 : index
    %c0_45 = arith.constant 0 : index
    %133 = vector.load %arg9[%c0_43, %c0_44, %c0_45] : memref<1x8x128xbf16, #tpu.memory_space<vmem>>, vector<1x8x128xbf16>
    %134 = vector.shape_cast %133 : vector<1x8x128xbf16> to vector<8x128xbf16>
    %135 = vector.shape_cast %132 : vector<8x128xbf16> to vector<1x8x128xbf16>
    tpu.vector_store %arg9[%c0_43, %c0_44, %c0_45], %135 {strides = array<i32>} : memref<1x8x128xbf16, #tpu.memory_space<vmem>>, vector<1x8x128xbf16>,
    return
  }
  func.func @transform_0(%arg0: i32) -> (i32, i32, i32) {
    %c0_i32 = arith.constant 0 : i32
    %c0_i32_0 = arith.constant 0 : i32
    %c0_i32_1 = arith.constant 0 : i32
    return %arg0, %c0_i32, %c0_i32_0 : i32, i32, i32
  }
  func.func @transform_1(%arg0: i32) -> (i32, i32, i32) {
    %c0_i32 = arith.constant 0 : i32
    %c0_i32_0 = arith.constant 0 : i32
    %c0_i32_1 = arith.constant 0 : i32
    return %arg0, %c0_i32, %c0_i32_0 : i32, i32, i32
  }
  func.func @transform_2(%arg0: i32) -> (i32, i32) {
    %c0_i32 = arith.constant 0 : i32
    %c0_i32_0 = arith.constant 0 : i32
    %c0_i32_1 = arith.constant 0 : i32
    return %c0_i32, %c0_i32_0 : i32, i32
  }
  func.func @transform_3(%arg0: i32) -> (i32, i32) {
    %c0_i32 = arith.constant 0 : i32
    %c0_i32_0 = arith.constant 0 : i32
    %c0_i32_1 = arith.constant 0 : i32
    return %c0_i32, %c0_i32_0 : i32, i32
  }
  func.func @transform_4(%arg0: i32) -> (i32, i32) {
    %c0_i32 = arith.constant 0 : i32
    %c0_i32_0 = arith.constant 0 : i32
    %c0_i32_1 = arith.constant 0 : i32
    return %c0_i32, %c0_i32_0 : i32, i32
  }
  func.func @transform_5(%arg0: i32) -> (i32, i32) {
    %c0_i32 = arith.constant 0 : i32
    %c0_i32_0 = arith.constant 0 : i32
    %c0_i32_1 = arith.constant 0 : i32
    return %c0_i32, %c0_i32_0 : i32, i32
  }
  func.func @transform_6(%arg0: i32) -> (i32, i32) {
    %c0_i32 = arith.constant 0 : i32
    %c0_i32_0 = arith.constant 0 : i32
    %c0_i32_1 = arith.constant 0 : i32
    return %c0_i32, %c0_i32_0 : i32, i32
  }
  func.func @transform_7(%arg0: i32) -> (i32, i32) {
    %c0_i32 = arith.constant 0 : i32
    %c0_i32_0 = arith.constant 0 : i32
    %c0_i32_1 = arith.constant 0 : i32
    return %c0_i32, %c0_i32_0 : i32, i32
  }
  func.func @transform_8(%arg0: i32) -> (i32, i32, i32) {
    %c0_i32 = arith.constant 0 : i32
    %c0_i32_0 = arith.constant 0 : i32
    %c0_i32_1 = arith.constant 0 : i32
    return %arg0, %c0_i32, %c0_i32_0 : i32, i32, i32
  }
}

module attributes {stable_mosaic.version = 11 : i64} {
  func.func @_ce_loss_kernel(%arg0: i32, %arg1: memref<16x128xf32, #tpu.memory_space<vmem>>, %arg2: memref<16x1xf32, #tpu.memory_space<vmem>>, %arg3: memref<1x128xf32, #tpu.memory_space<vmem>>) attributes {dimension_semantics = [#tpu.dimension_semantics<arbitrary>], iteration_bounds = array<i64: 1>, scalar_prefetch = 0 : i64, scratch_operands = 0 : i64, tpu.core_type = #tpu.core_type<tc>, window_params = [{transform_indices = @transform_0, window_bounds = array<i64: 16, 128>}, {transform_indices = @transform_1, window_bounds = array<i64: 16, 1>}, {pipeline_mode = #tpu.pipeline_mode<synchronous>, transform_indices = @transform_2, window_bounds = array<i64: 1, 128>}]} {
    %c0_i32 = arith.constant 0 : i32
    %0 = arith.cmpi eq, %arg0, %c0_i32 : i32
    %1 = arith.extui %0 : i1 to i32
    %c0_i32_0 = arith.constant 0 : i32
    %2 = arith.cmpi ne, %1, %c0_i32_0 : i32
    scf.if %2 {
      %cst_18 = arith.constant 0.000000e+00 : f32
      %66 = vector.broadcast %cst_18 : f32 to vector<1x128xf32>
      %c0_19 = arith.constant 0 : index
      %c0_20 = arith.constant 0 : index
      %67 = vector.load %arg3[%c0_19, %c0_20] : memref<1x128xf32, #tpu.memory_space<vmem>>, vector<1x128xf32>
      tpu.vector_store %arg3[%c0_19, %c0_20], %66 {strides = array<i32>} : memref<1x128xf32, #tpu.memory_space<vmem>>, vector<1x128xf32>,
    } else {
    }
    %c0 = arith.constant 0 : index
    %c0_1 = arith.constant 0 : index
    %3 = vector.load %arg1[%c0, %c0_1] : memref<16x128xf32, #tpu.memory_space<vmem>>, vector<16x128xf32>
    %4 = vector.extract_strided_slice %3 {offsets = [0, 0], sizes = [16, 2], strides = [1, 1]} : vector<16x128xf32> to vector<16x2xf32>
    %c0_2 = arith.constant 0 : index
    %c0_3 = arith.constant 0 : index
    %5 = vector.load %arg2[%c0_2, %c0_3] : memref<16x1xf32, #tpu.memory_space<vmem>>, vector<16x1xf32>
    %cst = arith.constant dense<0xFF800000> : vector<16xf32>
    %6 = vector.multi_reduction <maximumf>, %4, %cst [1] : vector<16x2xf32> to vector<16xf32>
    %7 = vector.shape_cast %6 : vector<16xf32> to vector<16x1xf32>
    %8 = vector.broadcast %7 : vector<16x1xf32> to vector<16x2xf32>
    %9 = arith.subf %4, %8 : vector<16x2xf32>
    %10 = math.exp %9 : vector<16x2xf32>
    %cst_4 = arith.constant dense<0.000000e+00> : vector<16xf32>
    %11 = vector.multi_reduction <add>, %10, %cst_4 [1] : vector<16x2xf32> to vector<16xf32>
    %12 = vector.shape_cast %11 : vector<16xf32> to vector<16x1xf32>
    %13 = math.log %12 : vector<16x1xf32>
    %14 = arith.addf %7, %13 : vector<16x1xf32>
    %cst_5 = arith.constant 1.000000e+00 : f32
    %15 = vector.broadcast %cst_5 : f32 to vector<16x1xf32>
    %16 = arith.subf %15, %5 : vector<16x1xf32>
    %17 = vector.extract_strided_slice %4 {offsets = [0, 0], sizes = [16, 1], strides = [1, 1]} : vector<16x2xf32> to vector<16x1xf32>
    %18 = arith.mulf %16, %17 : vector<16x1xf32>
    %19 = vector.extract_strided_slice %4 {offsets = [0, 1], sizes = [16, 1], strides = [1, 1]} : vector<16x2xf32> to vector<16x1xf32>
    %20 = arith.mulf %5, %19 : vector<16x1xf32>
    %21 = arith.addf %18, %20 : vector<16x1xf32>
    %22 = arith.subf %14, %21 : vector<16x1xf32>
    %cst_6 = arith.constant 1.000000e+00 : f32
    %23 = vector.broadcast %cst_6 : f32 to vector<16x1xf32>
    %24 = arith.cmpf oeq, %5, %23 : vector<16x1xf32>
    %25 = arith.extui %24 : vector<16x1xi1> to vector<16x1xi32>
    %26 = arith.sitofp %25 : vector<16x1xi32> to vector<16x1xf32>
    %cst_7 = arith.constant 0.000000e+00 : f32
    %27 = vector.broadcast %cst_7 : f32 to vector<16x1xf32>
    %28 = arith.cmpf oeq, %5, %27 : vector<16x1xf32>
    %29 = arith.extui %28 : vector<16x1xi1> to vector<16x1xi32>
    %30 = arith.sitofp %29 : vector<16x1xi32> to vector<16x1xf32>
    %31 = tpu.iota {dimensions = array<i32: 1>} : vector<16x128xi32>
    %c0_i32_8 = arith.constant 0 : i32
    %32 = vector.broadcast %c0_i32_8 : i32 to vector<16x128xi32>
    %33 = arith.cmpi eq, %31, %32 : vector<16x128xi32>
    %34 = arith.mulf %22, %26 : vector<16x1xf32>
    %cst_9 = arith.constant 0.000000e+00 : f32
    %35 = vector.shape_cast %34 : vector<16x1xf32> to vector<16x1xf32>
    %36 = vector.broadcast %35 : vector<16x1xf32> to vector<16x128xf32>
    %37 = vector.broadcast %cst_9 : f32 to vector<16x128xf32>
    %38 = arith.select %33, %36, %37 : vector<16x128xi1>, vector<16x128xf32>
    %c1_i32 = arith.constant 1 : i32
    %39 = vector.broadcast %c1_i32 : i32 to vector<16x128xi32>
    %40 = arith.cmpi eq, %31, %39 : vector<16x128xi32>
    %cst_10 = arith.constant 0.000000e+00 : f32
    %41 = vector.shape_cast %26 : vector<16x1xf32> to vector<16x1xf32>
    %42 = vector.broadcast %41 : vector<16x1xf32> to vector<16x128xf32>
    %43 = vector.broadcast %cst_10 : f32 to vector<16x128xf32>
    %44 = arith.select %40, %42, %43 : vector<16x128xi1>, vector<16x128xf32>
    %45 = arith.addf %38, %44 : vector<16x128xf32>
    %c2_i32 = arith.constant 2 : i32
    %46 = vector.broadcast %c2_i32 : i32 to vector<16x128xi32>
    %47 = arith.cmpi eq, %31, %46 : vector<16x128xi32>
    %48 = arith.mulf %22, %30 : vector<16x1xf32>
    %cst_11 = arith.constant 0.000000e+00 : f32
    %49 = vector.shape_cast %48 : vector<16x1xf32> to vector<16x1xf32>
    %50 = vector.broadcast %49 : vector<16x1xf32> to vector<16x128xf32>
    %51 = vector.broadcast %cst_11 : f32 to vector<16x128xf32>
    %52 = arith.select %47, %50, %51 : vector<16x128xi1>, vector<16x128xf32>
    %53 = arith.addf %45, %52 : vector<16x128xf32>
    %c3_i32 = arith.constant 3 : i32
    %54 = vector.broadcast %c3_i32 : i32 to vector<16x128xi32>
    %55 = arith.cmpi eq, %31, %54 : vector<16x128xi32>
    %cst_12 = arith.constant 0.000000e+00 : f32
    %56 = vector.shape_cast %30 : vector<16x1xf32> to vector<16x1xf32>
    %57 = vector.broadcast %56 : vector<16x1xf32> to vector<16x128xf32>
    %58 = vector.broadcast %cst_12 : f32 to vector<16x128xf32>
    %59 = arith.select %55, %57, %58 : vector<16x128xi1>, vector<16x128xf32>
    %60 = arith.addf %53, %59 : vector<16x128xf32>
    %c0_13 = arith.constant 0 : index
    %c0_14 = arith.constant 0 : index
    %61 = vector.load %arg3[%c0_13, %c0_14] : memref<1x128xf32, #tpu.memory_space<vmem>>, vector<1x128xf32>
    %cst_15 = arith.constant dense<0.000000e+00> : vector<128xf32>
    %62 = vector.multi_reduction <add>, %60, %cst_15 [0] : vector<16x128xf32> to vector<128xf32>
    %63 = vector.shape_cast %62 : vector<128xf32> to vector<1x128xf32>
    %64 = arith.addf %61, %63 : vector<1x128xf32>
    %c0_16 = arith.constant 0 : index
    %c0_17 = arith.constant 0 : index
    %65 = vector.load %arg3[%c0_16, %c0_17] : memref<1x128xf32, #tpu.memory_space<vmem>>, vector<1x128xf32>
    tpu.vector_store %arg3[%c0_16, %c0_17], %64 {strides = array<i32>} : memref<1x128xf32, #tpu.memory_space<vmem>>, vector<1x128xf32>,
    return
  }
  func.func @transform_0(%arg0: i32) -> (i32, i32) {
    %c0_i32 = arith.constant 0 : i32
    %c0_i32_0 = arith.constant 0 : i32
    return %arg0, %c0_i32 : i32, i32
  }
  func.func @transform_1(%arg0: i32) -> (i32, i32) {
    %c0_i32 = arith.constant 0 : i32
    %c0_i32_0 = arith.constant 0 : i32
    return %arg0, %c0_i32 : i32, i32
  }
  func.func @transform_2(%arg0: i32) -> (i32, i32) {
    %c0_i32 = arith.constant 0 : i32
    %c0_i32_0 = arith.constant 0 : i32
    %c0_i32_1 = arith.constant 0 : i32
    return %c0_i32, %c0_i32_0 : i32, i32
  }
}

</mosaic_0001>

<llo_original>
// kernel: bert_forward.12
$region0: #{bert_forward.12}
  #allocation0 [shape = 'u32[]', space=smem, size = 0x4, offset = 0x4, fixed_abs, tag = 'smem constant byte address 0x4 - core index']
  #allocation1 [shape = 'u32[144,128]{1,0:T(1,128)}', space=vmem, size = 0x12000, scoped, tag = 'internal scratch']
  %s0 = inlined_call_operand.vmem [shape: bf16[16,128], index: 0, kind: input, shape index: {}]
  %s1 = inlined_call_operand.vmem [shape: bf16[128,128], index: 1, kind: input, shape index: {}]
  %s2 = inlined_call_operand.vmem [shape: f32[1,128], index: 2, kind: input, shape index: {}]
  %s3 = inlined_call_operand.vmem [shape: bf16[128,128], index: 3, kind: input, shape index: {}]
  %s4 = inlined_call_operand.vmem [shape: f32[1,128], index: 4, kind: input, shape index: {}]
  %s5 = inlined_call_operand.vmem [shape: f32[16,128], index: 5, kind: output, shape index: {}]
  %s6 = sld [smem:[#allocation0]]
  $region30: #{bert_forward.12} parent=0
    _
  %s8 = ssub.s32 1, %s6
  %s9 = scalar_select 0, %s8, %s6
  // Predicated region
  $region2: #{bert_forward.12} parent=0 // pred_check
    _
  $region3: #{bert_forward.12} parent=0 // pred_check_branch
    %11 = sbr.rel (0) target = $region5
  $region4: #{bert_forward.12} parent=0 // pred_region
    _
  $region5: #{bert_forward.12} parent=0 // pred_fallthru
    _
  // Predicated region
  $region6: #{bert_forward.12} parent=0 // pred_check
    _
  $region7: #{bert_forward.12} parent=0 // pred_check_branch
    %13 = sbr.rel (0) target = $region9
  $region8: #{bert_forward.12} parent=0 // pred_region
    _
  $region9: #{bert_forward.12} parent=0 // pred_fallthru
    _
  // Predicated region
  $region10: #{bert_forward.12} parent=0 // pred_check
    _
  $region11: #{bert_forward.12} parent=0 // pred_check_branch
    %15 = sbr.rel (0) target = $region13
  $region12: #{bert_forward.12} parent=0 // pred_region
    _
  $region13: #{bert_forward.12} parent=0 // pred_fallthru
    _
  // Predicated region
  $region14: #{bert_forward.12} parent=0 // pred_check
    _
  $region15: #{bert_forward.12} parent=0 // pred_check_branch
    %17 = sbr.rel (0) target = $region17
  $region16: #{bert_forward.12} parent=0 // pred_region
    _
  $region17: #{bert_forward.12} parent=0 // pred_fallthru
    _
  // Predicated region
  $region18: #{bert_forward.12} parent=0 // pred_check
    _
  $region19: #{bert_forward.12} parent=0 // pred_check_branch
    %19 = sbr.rel (0) target = $region21
  $region20: #{bert_forward.12} parent=0 // pred_region
    _
  $region21: #{bert_forward.12} parent=0 // pred_fallthru
    _
  %v21 = vld [vmem:[%s0] sm:$0xf]
  %v22 = vld [vmem:[%s0 + $0x4] sm:$0xf]
  %v23 = vld [vmem:[%s1] sm:$0xf]
  %v24 = vld [vmem:[%s1 + $0x4] sm:$0xf]
  %v25 = vld [vmem:[%s1 + $0x8] sm:$0xf]
  %v26 = vld [vmem:[%s1 + $0xc] sm:$0xf]
  %v27 = vld [vmem:[%s1 + $0x10] sm:$0xf]
  %v28 = vld [vmem:[%s1 + $0x14] sm:$0xf]
  %v29 = vld [vmem:[%s1 + $0x18] sm:$0xf]
  %v30 = vld [vmem:[%s1 + $0x1c] sm:$0xf]
  %v31 = vld [vmem:[%s1 + $0x20] sm:$0xf]
  %v32 = vld [vmem:[%s1 + $0x24] sm:$0xf]
  %v33 = vld [vmem:[%s1 + $0x28] sm:$0xf]
  %v34 = vld [vmem:[%s1 + $0x2c] sm:$0xf]
  %v35 = vld [vmem:[%s1 + $0x30] sm:$0xf]
  %v36 = vld [vmem:[%s1 + $0x34] sm:$0xf]
  %v37 = vld [vmem:[%s1 + $0x38] sm:$0xf]
  %v38 = vld [vmem:[%s1 + $0x3c] sm:$0xf]
  %v39 = vld [vmem:[%s2] sm:$0x1]
  %v41 = vlaneseq
  %v42 = vshrl.u32 %v41, 7
  %v43 = vsub.s32 0, %v42
  %v44 = vrot.slane %v39, %v43
  %v48 = vunpack.c.l.b16 %v21
  %v49 = vunpack.c.l.b16 %v22
  %v50 = vpack.c.b16 %v49, %v48
  %v68 = vunpack.c.l.b16 %v23
  %v69 = vunpack.c.l.b16 %v24
  %v70 = vunpack.c.l.b16 %v25
  %v71 = vunpack.c.l.b16 %v26
  %v72 = vunpack.c.l.b16 %v27
  %v73 = vunpack.c.l.b16 %v28
  %v74 = vunpack.c.l.b16 %v29
  %v75 = vunpack.c.l.b16 %v30
  %v76 = vunpack.c.l.b16 %v31
  %v77 = vunpack.c.l.b16 %v32
  %v78 = vunpack.c.l.b16 %v33
  %v79 = vunpack.c.l.b16 %v34
  %v80 = vunpack.c.l.b16 %v35
  %v81 = vunpack.c.l.b16 %v36
  %v82 = vunpack.c.l.b16 %v37
  %v83 = vunpack.c.l.b16 %v38
  %v84 = vpack.c.b16 %v69, %v68
  %v85 = vpack.c.b16 %v71, %v70
  %v86 = vpack.c.b16 %v73, %v72
  %v87 = vpack.c.b16 %v75, %v74
  %v88 = vpack.c.b16 %v77, %v76
  %v89 = vpack.c.b16 %v79, %v78
  %v90 = vpack.c.b16 %v81, %v80
  %v91 = vpack.c.b16 %v83, %v82
  %100 = vmatprep.subr.bf16.mxu0 0
  %101 = vmatpush1.bf16.msra.mxu0 %v91
  %102 = vmatprep.subr.bf16.mxu0 0
  %103 = vmatpush1.bf16.msra.mxu0 %v90
  %104 = vmatprep.subr.bf16.mxu0 0
  %105 = vmatpush1.bf16.msra.mxu0 %v89
  %106 = vmatprep.subr.bf16.mxu0 0
  %107 = vmatpush1.bf16.msra.mxu0 %v88
  %108 = vmatprep.subr.bf16.mxu0 0
  %109 = vmatpush1.bf16.msra.mxu0 %v87
  %110 = vmatprep.subr.bf16.mxu0 0
  %111 = vmatpush1.bf16.msra.mxu0 %v86
  %112 = vmatprep.subr.bf16.mxu0 0
  %113 = vmatpush1.bf16.msra.mxu0 %v85
  %114 = vmatprep.subr.bf16.mxu0 0
  %115 = vmatpush1.bf16.msra.mxu0 %v84
  %116 = vmatprep.subr.bf16.mxu0 0
  %117 = vmatpush2.bf16.msra.mxu0 0
  %118 = vmatprep.subr.bf16.mxu0 0
  %119 = vmatpush2.bf16.msra.mxu0 0
  %120 = vmatprep.subr.bf16.mxu0 0
  %121 = vmatpush2.bf16.msra.mxu0 0
  %122 = vmatprep.subr.bf16.mxu0 0
  %123 = vmatpush2.bf16.msra.mxu0 0
  %124 = vmatprep.subr.bf16.mxu0 0
  %125 = vmatpush2.bf16.msra.mxu0 0
  %126 = vmatprep.subr.bf16.mxu0 0
  %127 = vmatpush2.bf16.msra.mxu0 0
  %128 = vmatprep.subr.bf16.mxu0 0
  %129 = vmatpush2.bf16.msra.mxu0 0
  %130 = vmatprep.subr.bf16.mxu0 0
  %131 = vmatpush2.bf16.msra.mxu0 0
  %132 = vmatprep.mubr.bf16.mxu0 0
  %133 = vmatmul.mubr.bf16.gmra.mxu0 %v50
  %v134 = vpop.f32.mrf.mxu0
  %v135 = vadd.f32 %v44, %v134
  %v136 = vpop.f32.mrf.mxu0
  %v137 = vpop.f32.mrf.mxu0
  %v138 = vadd.f32 %v44, %v137
  %v139 = vpop.f32.mrf.mxu0
  %140 = vdwg.mxu0
  %v141 = vtanh.pop %v135
  %v142 = vtanh.pop %v138
  %v143 = vpack.c.bf16 %v142, %v141
  %v144 = vld [vmem:[%s3] sm:$0xf]
  %v145 = vld [vmem:[%s3 + $0x4] sm:$0xf]
  %v146 = vld [vmem:[%s3 + $0x8] sm:$0xf]
  %v147 = vld [vmem:[%s3 + $0xc] sm:$0xf]
  %v148 = vld [vmem:[%s3 + $0x10] sm:$0xf]
  %v149 = vld [vmem:[%s3 + $0x14] sm:$0xf]
  %v150 = vld [vmem:[%s3 + $0x18] sm:$0xf]
  %v151 = vld [vmem:[%s3 + $0x1c] sm:$0xf]
  %v152 = vld [vmem:[%s3 + $0x20] sm:$0xf]
  %v153 = vld [vmem:[%s3 + $0x24] sm:$0xf]
  %v154 = vld [vmem:[%s3 + $0x28] sm:$0xf]
  %v155 = vld [vmem:[%s3 + $0x2c] sm:$0xf]
  %v156 = vld [vmem:[%s3 + $0x30] sm:$0xf]
  %v157 = vld [vmem:[%s3 + $0x34] sm:$0xf]
  %v158 = vld [vmem:[%s3 + $0x38] sm:$0xf]
  %v159 = vld [vmem:[%s3 + $0x3c] sm:$0xf]
  %v160 = vld [vmem:[%s4] sm:$0x1]
  %v162 = vlaneseq
  %v163 = vshrl.u32 %v162, 7
  %v164 = vsub.s32 0, %v163
  %v165 = vrot.slane %v160, %v164
  %v183 = vunpack.c.l.b16 %v144
  %v184 = vunpack.c.l.b16 %v145
  %v185 = vunpack.c.l.b16 %v146
  %v186 = vunpack.c.l.b16 %v147
  %v187 = vunpack.c.l.b16 %v148
  %v188 = vunpack.c.l.b16 %v149
  %v189 = vunpack.c.l.b16 %v150
  %v190 = vunpack.c.l.b16 %v151
  %v191 = vunpack.c.l.b16 %v152
  %v192 = vunpack.c.l.b16 %v153
  %v193 = vunpack.c.l.b16 %v154
  %v194 = vunpack.c.l.b16 %v155
  %v195 = vunpack.c.l.b16 %v156
  %v196 = vunpack.c.l.b16 %v157
  %v197 = vunpack.c.l.b16 %v158
  %v198 = vunpack.c.l.b16 %v159
  %v199 = vpack.c.b16 %v184, %v183
  %v200 = vpack.c.b16 %v186, %v185
  %v201 = vpack.c.b16 %v188, %v187
  %v202 = vpack.c.b16 %v190, %v189
  %v203 = vpack.c.b16 %v192, %v191
  %v204 = vpack.c.b16 %v194, %v193
  %v205 = vpack.c.b16 %v196, %v195
  %v206 = vpack.c.b16 %v198, %v197
  %215 = vmatprep.subr.bf16.mxu0 0
  %216 = vmatpush1.bf16.msra.mxu0 %v206
  %217 = vmatprep.subr.bf16.mxu0 0
  %218 = vmatpush1.bf16.msra.mxu0 %v205
  %219 = vmatprep.subr.bf16.mxu0 0
  %220 = vmatpush1.bf16.msra.mxu0 %v204
  %221 = vmatprep.subr.bf16.mxu0 0
  %222 = vmatpush1.bf16.msra.mxu0 %v203
  %223 = vmatprep.subr.bf16.mxu0 0
  %224 = vmatpush1.bf16.msra.mxu0 %v202
  %225 = vmatprep.subr.bf16.mxu0 0
  %226 = vmatpush1.bf16.msra.mxu0 %v201
  %227 = vmatprep.subr.bf16.mxu0 0
  %228 = vmatpush1.bf16.msra.mxu0 %v200
  %229 = vmatprep.subr.bf16.mxu0 0
  %230 = vmatpush1.bf16.msra.mxu0 %v199
  %231 = vmatprep.subr.bf16.mxu0 0
  %232 = vmatpush2.bf16.msra.mxu0 0
  %233 = vmatprep.subr.bf16.mxu0 0
  %234 = vmatpush2.bf16.msra.mxu0 0
  %235 = vmatprep.subr.bf16.mxu0 0
  %236 = vmatpush2.bf16.msra.mxu0 0
  %237 = vmatprep.subr.bf16.mxu0 0
  %238 = vmatpush2.bf16.msra.mxu0 0
  %239 = vmatprep.subr.bf16.mxu0 0
  %240 = vmatpush2.bf16.msra.mxu0 0
  %241 = vmatprep.subr.bf16.mxu0 0
  %242 = vmatpush2.bf16.msra.mxu0 0
  %243 = vmatprep.subr.bf16.mxu0 0
  %244 = vmatpush2.bf16.msra.mxu0 0
  %245 = vmatprep.subr.bf16.mxu0 0
  %246 = vmatpush2.bf16.msra.mxu0 0
  %247 = vmatprep.mubr.bf16.mxu0 0
  %248 = vmatmul.mubr.bf16.gmra.mxu0 %v143
  %v249 = vpop.f32.mrf.mxu0
  %v250 = vadd.f32 %v165, %v249
  %v251 = vpop.f32.mrf.mxu0
  %v252 = vpop.f32.mrf.mxu0
  %v253 = vadd.f32 %v165, %v252
  %v254 = vpop.f32.mrf.mxu0
  %255 = vdwg.mxu0
  %256 = vst [vmem:[%s5] sm:$0xff] %v250
  %257 = vst [vmem:[%s5 + $0x8] sm:$0xff] %v253
  // Predicated region
  $region22: #{bert_forward.12} parent=0 // pred_check
    _
  $region23: #{bert_forward.12} parent=0 // pred_check_branch
    %259 = sbr.rel (0) target = $region25
  $region24: #{bert_forward.12} parent=0 // pred_region
    _
  $region25: #{bert_forward.12} parent=0 // pred_fallthru
    _
  // Predicated region
  $region26: #{bert_forward.12} parent=0 // pred_check
    _
  $region27: #{bert_forward.12} parent=0 // pred_check_branch
    %261 = sbr.rel (0) target = $region29
  $region28: #{bert_forward.12} parent=0 // pred_region
    _
  $region29: #{bert_forward.12} parent=0 // pred_fallthru
    _

// kernel: bert_forward.7
$region0: #{bert_forward.7}
  #allocation0 [shape = 'u32[]', space=smem, size = 0x4, offset = 0x4, fixed_abs, tag = 'smem constant byte address 0x4 - core index']
  #allocation1 [shape = 'u32[144,128]{1,0:T(1,128)}', space=vmem, size = 0x12000, scoped, tag = 'internal scratch']
  %s0 = inlined_call_operand.vmem [shape: f32[16,128], index: 0, kind: input, shape index: {}]
  %s1 = inlined_call_operand.vmem [shape: f32[16,128], index: 1, kind: input, shape index: {}]
  %s2 = inlined_call_operand.vmem [shape: f32[1,128], index: 2, kind: input, shape index: {}]
  %s3 = inlined_call_operand.vmem [shape: f32[1,128], index: 3, kind: input, shape index: {}]
  %s4 = inlined_call_operand.vmem [shape: f32[1,128], index: 4, kind: input, shape index: {}]
  %s5 = inlined_call_operand.vmem [shape: bf16[16,128], index: 5, kind: output, shape index: {}]
  %s6 = sld [smem:[#allocation0]]
  $region30: #{bert_forward.7} parent=0
    _
  %s8 = ssub.s32 1, %s6
  %s9 = scalar_select 0, %s8, %s6
  // Predicated region
  $region2: #{bert_forward.7} parent=0 // pred_check
    _
  $region3: #{bert_forward.7} parent=0 // pred_check_branch
    %11 = sbr.rel (0) target = $region5
  $region4: #{bert_forward.7} parent=0 // pred_region
    _
  $region5: #{bert_forward.7} parent=0 // pred_fallthru
    _
  // Predicated region
  $region6: #{bert_forward.7} parent=0 // pred_check
    _
  $region7: #{bert_forward.7} parent=0 // pred_check_branch
    %13 = sbr.rel (0) target = $region9
  $region8: #{bert_forward.7} parent=0 // pred_region
    _
  $region9: #{bert_forward.7} parent=0 // pred_fallthru
    _
  // Predicated region
  $region10: #{bert_forward.7} parent=0 // pred_check
    _
  $region11: #{bert_forward.7} parent=0 // pred_check_branch
    %15 = sbr.rel (0) target = $region13
  $region12: #{bert_forward.7} parent=0 // pred_region
    _
  $region13: #{bert_forward.7} parent=0 // pred_fallthru
    _
  // Predicated region
  $region14: #{bert_forward.7} parent=0 // pred_check
    _
  $region15: #{bert_forward.7} parent=0 // pred_check_branch
    %17 = sbr.rel (0) target = $region17
  $region16: #{bert_forward.7} parent=0 // pred_region
    _
  $region17: #{bert_forward.7} parent=0 // pred_fallthru
    _
  // Predicated region
  $region18: #{bert_forward.7} parent=0 // pred_check
    _
  $region19: #{bert_forward.7} parent=0 // pred_check_branch
    %19 = sbr.rel (0) target = $region21
  $region20: #{bert_forward.7} parent=0 // pred_region
    _
  $region21: #{bert_forward.7} parent=0 // pred_fallthru
    _
  %v20 = vld [vmem:[%s0] sm:$0xff]
  %v21 = vld [vmem:[%s0 + $0x8] sm:$0xff]
  %v22 = vld [vmem:[%s1] sm:$0xff]
  %v23 = vld [vmem:[%s1 + $0x8] sm:$0xff]
  %v24 = vadd.f32 %v20, %v22
  %v25 = vadd.f32 %v21, %v23
  %v26 = vld [vmem:[%s2] sm:$0x1]
  %v28 = vlaneseq
  %v29 = vshrl.u32 %v28, 7
  %v30 = vsub.s32 0, %v29
  %v31 = vrot.slane %v26, %v30
  %v33 = vadd.f32 %v24, %v31
  %v34 = vadd.f32 %v25, %v31
  %35 = vadd.xlane.f32.xlu0 %v33
  %v36 = vpop.xlane.xlu0 %35
  %37 = vadd.xlane.f32.xlu0 %v34
  %v38 = vpop.xlane.xlu0 %37
  %v39 = vrcp.pop 128.0
  %v40 = vmul.f32 %v36, %v39
  %v41 = vmul.f32 %v38, %v39
  %v42 = vsub.f32 %v33, %v40
  %v43 = vsub.f32 %v34, %v41
  %v44 = vmul.f32 %v42, %v42
  %v45 = vmul.f32 %v43, %v43
  %46 = vadd.xlane.f32.xlu0 %v44
  %v47 = vpop.xlane.xlu0 %46
  %48 = vadd.xlane.f32.xlu0 %v45
  %v49 = vpop.xlane.xlu0 %48
  %v50 = vmul.f32 %v47, %v39
  %v51 = vmul.f32 %v49, %v39
  %v52 = vadd.f32 %v50, 1e-12
  %v53 = vadd.f32 %v51, 1e-12
  %v54 = vrsqrt.pop %v52
  %v55 = vrsqrt.pop %v53
  %v56 = vmul.f32 %v42, %v54
  %v57 = vmul.f32 %v43, %v55
  %v58 = vld [vmem:[%s3] sm:$0x1]
  %v60 = vlaneseq
  %v61 = vshrl.u32 %v60, 7
  %v62 = vsub.s32 0, %v61
  %v63 = vrot.slane %v58, %v62
  %v65 = vmul.f32 %v56, %v63
  %v66 = vmul.f32 %v57, %v63
  %v67 = vld [vmem:[%s4] sm:$0x1]
  %v69 = vlaneseq
  %v70 = vshrl.u32 %v69, 7
  %v71 = vsub.s32 0, %v70
  %v72 = vrot.slane %v67, %v71
  %v74 = vadd.f32 %v65, %v72
  %v75 = vadd.f32 %v66, %v72
  %v76 = vpack.c.bf16 %v75, %v74
  %v78 = vunpack.c.l.b16 %v76
  %v79 = vunpack.c.h.b16 %v76
  %v80 = vpack.c.b16 %v78, %v78
  %v81 = vpack.c.b16 %v79, %v79
  %84 = vst [vmem:[%s5] sm:$0xf] %v80
  %85 = vst [vmem:[%s5 + $0x4] sm:$0xf] %v81
  // Predicated region
  $region22: #{bert_forward.7} parent=0 // pred_check
    _
  $region23: #{bert_forward.7} parent=0 // pred_check_branch
    %87 = sbr.rel (0) target = $region25
  $region24: #{bert_forward.7} parent=0 // pred_region
    _
  $region25: #{bert_forward.7} parent=0 // pred_fallthru
    _
  // Predicated region
  $region26: #{bert_forward.7} parent=0 // pred_check
    _
  $region27: #{bert_forward.7} parent=0 // pred_check_branch
    %89 = sbr.rel (0) target = $region29
  $region28: #{bert_forward.7} parent=0 // pred_region
    _
  $region29: #{bert_forward.7} parent=0 // pred_fallthru
    _

// kernel: bert_forward.9
$region0: #{bert_forward.9}
  #allocation0 [shape = 'u32[]', space=smem, size = 0x4, offset = 0x4, fixed_abs, tag = 'smem constant byte address 0x4 - core index']
  #allocation1 [shape = 'u32[144,128]{1,0:T(1,128)}', space=vmem, size = 0x12000, scoped, tag = 'internal scratch']
  %s0 = inlined_call_operand.vmem [shape: bf16[16,128], index: 0, kind: input, shape index: {}]
  %s1 = inlined_call_operand.vmem [shape: bf16[128,256], index: 1, kind: input, shape index: {}]
  %s2 = inlined_call_operand.vmem [shape: f32[1,256], index: 2, kind: input, shape index: {}]
  %s3 = inlined_call_operand.vmem [shape: bf16[256,128], index: 3, kind: input, shape index: {}]
  %s4 = inlined_call_operand.vmem [shape: f32[1,128], index: 4, kind: input, shape index: {}]
  %s5 = inlined_call_operand.vmem [shape: f32[1,128], index: 5, kind: input, shape index: {}]
  %s6 = inlined_call_operand.vmem [shape: f32[1,128], index: 6, kind: input, shape index: {}]
  %s7 = inlined_call_operand.vmem [shape: bf16[16,128], index: 7, kind: output, shape index: {}]
  %s8 = sld [smem:[#allocation0]]
  $region38: #{bert_forward.9} parent=0
    _
  %s10 = ssub.s32 1, %s8
  %s11 = scalar_select 0, %s10, %s8
  // Predicated region
  $region2: #{bert_forward.9} parent=0 // pred_check
    _
  $region3: #{bert_forward.9} parent=0 // pred_check_branch
    %13 = sbr.rel (0) target = $region5
  $region4: #{bert_forward.9} parent=0 // pred_region
    _
  $region5: #{bert_forward.9} parent=0 // pred_fallthru
    _
  // Predicated region
  $region6: #{bert_forward.9} parent=0 // pred_check
    _
  $region7: #{bert_forward.9} parent=0 // pred_check_branch
    %15 = sbr.rel (0) target = $region9
  $region8: #{bert_forward.9} parent=0 // pred_region
    _
  $region9: #{bert_forward.9} parent=0 // pred_fallthru
    _
  // Predicated region
  $region10: #{bert_forward.9} parent=0 // pred_check
    _
  $region11: #{bert_forward.9} parent=0 // pred_check_branch
    %17 = sbr.rel (0) target = $region13
  $region12: #{bert_forward.9} parent=0 // pred_region
    _
  $region13: #{bert_forward.9} parent=0 // pred_fallthru
    _
  // Predicated region
  $region14: #{bert_forward.9} parent=0 // pred_check
    _
  $region15: #{bert_forward.9} parent=0 // pred_check_branch
    %19 = sbr.rel (0) target = $region17
  $region16: #{bert_forward.9} parent=0 // pred_region
    _
  $region17: #{bert_forward.9} parent=0 // pred_fallthru
    _
  // Predicated region
  $region18: #{bert_forward.9} parent=0 // pred_check
    _
  $region19: #{bert_forward.9} parent=0 // pred_check_branch
    %21 = sbr.rel (0) target = $region21
  $region20: #{bert_forward.9} parent=0 // pred_region
    _
  $region21: #{bert_forward.9} parent=0 // pred_fallthru
    _
  // Predicated region
  $region22: #{bert_forward.9} parent=0 // pred_check
    _
  $region23: #{bert_forward.9} parent=0 // pred_check_branch
    %23 = sbr.rel (0) target = $region25
  $region24: #{bert_forward.9} parent=0 // pred_region
    _
  $region25: #{bert_forward.9} parent=0 // pred_fallthru
    _
  // Predicated region
  $region26: #{bert_forward.9} parent=0 // pred_check
    _
  $region27: #{bert_forward.9} parent=0 // pred_check_branch
    %25 = sbr.rel (0) target = $region29
  $region28: #{bert_forward.9} parent=0 // pred_region
    _
  $region29: #{bert_forward.9} parent=0 // pred_fallthru
    _
  %v27 = vld [vmem:[%s0] sm:$0xf]
  %v28 = vld [vmem:[%s0 + $0x4] sm:$0xf]
  %v29 = vld [vmem:[%s1] sm:$0xff]
  %v30 = vld [vmem:[%s1 + $0x8] sm:$0xff]
  %v31 = vld [vmem:[%s1 + $0x10] sm:$0xff]
  %v32 = vld [vmem:[%s1 + $0x18] sm:$0xff]
  %v33 = vld [vmem:[%s1 + $0x20] sm:$0xff]
  %v34 = vld [vmem:[%s1 + $0x28] sm:$0xff]
  %v35 = vld [vmem:[%s1 + $0x30] sm:$0xff]
  %v36 = vld [vmem:[%s1 + $0x38] sm:$0xff]
  %v37 = vld [vmem:[%s1 + $0x40] sm:$0xff]
  %v38 = vld [vmem:[%s1 + $0x48] sm:$0xff]
  %v39 = vld [vmem:[%s1 + $0x50] sm:$0xff]
  %v40 = vld [vmem:[%s1 + $0x58] sm:$0xff]
  %v41 = vld [vmem:[%s1 + $0x60] sm:$0xff]
  %v42 = vld [vmem:[%s1 + $0x68] sm:$0xff]
  %v43 = vld [vmem:[%s1 + $0x70] sm:$0xff]
  %v44 = vld [vmem:[%s1 + $0x78] sm:$0xff]
  %v45 = vld [vmem:[%s2] sm:$0x3]
  %v47 = vlaneseq
  %v48 = vshrl.u32 %v47, 7
  %v49 = vsub.s32 0, %v48
  %v50 = vrot.slane %v45, %v49
  %v51 = vlaneseq
  %v52 = vshrl.u32 %v51, 7
  %v53 = vsub.s32 1, %v52
  %v54 = vrot.slane %v45, %v53
  %v59 = vunpack.c.l.b16 %v27
  %v60 = vunpack.c.l.b16 %v28
  %v61 = vpack.c.b16 %v60, %v59
  %v79 = vunpack.c.l.b16 %v29
  %v80 = vunpack.c.h.b16 %v29
  %v81 = vunpack.c.l.b16 %v30
  %v82 = vunpack.c.h.b16 %v30
  %v83 = vunpack.c.l.b16 %v31
  %v84 = vunpack.c.h.b16 %v31
  %v85 = vunpack.c.l.b16 %v32
  %v86 = vunpack.c.h.b16 %v32
  %v87 = vunpack.c.l.b16 %v33
  %v88 = vunpack.c.h.b16 %v33
  %v89 = vunpack.c.l.b16 %v34
  %v90 = vunpack.c.h.b16 %v34
  %v91 = vunpack.c.l.b16 %v35
  %v92 = vunpack.c.h.b16 %v35
  %v93 = vunpack.c.l.b16 %v36
  %v94 = vunpack.c.h.b16 %v36
  %v95 = vunpack.c.l.b16 %v37
  %v96 = vunpack.c.h.b16 %v37
  %v97 = vunpack.c.l.b16 %v38
  %v98 = vunpack.c.h.b16 %v38
  %v99 = vunpack.c.l.b16 %v39
  %v100 = vunpack.c.h.b16 %v39
  %v101 = vunpack.c.l.b16 %v40
  %v102 = vunpack.c.h.b16 %v40
  %v103 = vunpack.c.l.b16 %v41
  %v104 = vunpack.c.h.b16 %v41
  %v105 = vunpack.c.l.b16 %v42
  %v106 = vunpack.c.h.b16 %v42
  %v107 = vunpack.c.l.b16 %v43
  %v108 = vunpack.c.h.b16 %v43
  %v109 = vunpack.c.l.b16 %v44
  %v110 = vunpack.c.h.b16 %v44
  %v111 = vpack.c.b16 %v81, %v79
  %v112 = vpack.c.b16 %v82, %v80
  %v113 = vpack.c.b16 %v85, %v83
  %v114 = vpack.c.b16 %v86, %v84
  %v115 = vpack.c.b16 %v89, %v87
  %v116 = vpack.c.b16 %v90, %v88
  %v117 = vpack.c.b16 %v93, %v91
  %v118 = vpack.c.b16 %v94, %v92
  %v119 = vpack.c.b16 %v97, %v95
  %v120 = vpack.c.b16 %v98, %v96
  %v121 = vpack.c.b16 %v101, %v99
  %v122 = vpack.c.b16 %v102, %v100
  %v123 = vpack.c.b16 %v105, %v103
  %v124 = vpack.c.b16 %v106, %v104
  %v125 = vpack.c.b16 %v109, %v107
  %v126 = vpack.c.b16 %v110, %v108
  %143 = vmatprep.subr.bf16.mxu0 %v126
  %144 = vmatpush1.bf16.msra.mxu0 %v125
  %145 = vmatprep.subr.bf16.mxu0 %v124
  %146 = vmatpush1.bf16.msra.mxu0 %v123
  %147 = vmatprep.subr.bf16.mxu0 %v122
  %148 = vmatpush1.bf16.msra.mxu0 %v121
  %149 = vmatprep.subr.bf16.mxu0 %v120
  %150 = vmatpush1.bf16.msra.mxu0 %v119
  %151 = vmatprep.subr.bf16.mxu0 %v118
  %152 = vmatpush1.bf16.msra.mxu0 %v117
  %153 = vmatprep.subr.bf16.mxu0 %v116
  %154 = vmatpush1.bf16.msra.mxu0 %v115
  %155 = vmatprep.subr.bf16.mxu0 %v114
  %156 = vmatpush1.bf16.msra.mxu0 %v113
  %157 = vmatprep.subr.bf16.mxu0 %v112
  %158 = vmatpush1.bf16.msra.mxu0 %v111
  %159 = vmatprep.subr.bf16.mxu0 0
  %160 = vmatpush2.bf16.msra.mxu0 0
  %161 = vmatprep.subr.bf16.mxu0 0
  %162 = vmatpush2.bf16.msra.mxu0 0
  %163 = vmatprep.subr.bf16.mxu0 0
  %164 = vmatpush2.bf16.msra.mxu0 0
  %165 = vmatprep.subr.bf16.mxu0 0
  %166 = vmatpush2.bf16.msra.mxu0 0
  %167 = vmatprep.subr.bf16.mxu0 0
  %168 = vmatpush2.bf16.msra.mxu0 0
  %169 = vmatprep.subr.bf16.mxu0 0
  %170 = vmatpush2.bf16.msra.mxu0 0
  %171 = vmatprep.subr.bf16.mxu0 0
  %172 = vmatpush2.bf16.msra.mxu0 0
  %173 = vmatprep.subr.bf16.mxu0 0
  %174 = vmatpush2.bf16.msra.mxu0 0
  %175 = vmatprep.mubr.bf16.mxu0 0
  %176 = vmatmul.mubr.bf16.gmra.mxu0 %v61
  %v177 = vpop.f32.mrf.mxu0
  %v178 = vadd.f32 %v50, %v177
  %v179 = vpop.f32.mrf.mxu0
  %v180 = vadd.f32 %v54, %v179
  %v181 = vpop.f32.mrf.mxu0
  %v182 = vadd.f32 %v50, %v181
  %v183 = vpop.f32.mrf.mxu0
  %v184 = vadd.f32 %v54, %v183
  %185 = vdwg.mxu0
  %v186 = vmul.f32 %v178, %v178
  %v187 = vmul.f32 %v180, %v180
  %v188 = vmul.f32 %v182, %v182
  %v189 = vmul.f32 %v184, %v184
  %v190 = vmul.f32 %v178, %v186
  %v191 = vmul.f32 %v180, %v187
  %v192 = vmul.f32 %v182, %v188
  %v193 = vmul.f32 %v184, %v189
  %v194 = vmul.f32 %v190, 0.044715
  %v195 = vmul.f32 %v191, 0.044715
  %v196 = vmul.f32 %v192, 0.044715
  %v197 = vmul.f32 %v193, 0.044715
  %v198 = vadd.f32 %v178, %v194
  %v199 = vadd.f32 %v180, %v195
  %v200 = vadd.f32 %v182, %v196
  %v201 = vadd.f32 %v184, %v197
  %v202 = vmul.f32 %v198, 0.7978846
  %v203 = vmul.f32 %v199, 0.7978846
  %v204 = vmul.f32 %v200, 0.7978846
  %v205 = vmul.f32 %v201, 0.7978846
  %v206 = vtanh.pop %v202
  %v207 = vtanh.pop %v203
  %v208 = vtanh.pop %v204
  %v209 = vtanh.pop %v205
  %v210 = vadd.f32 %v206, 1.0
  %v211 = vadd.f32 %v207, 1.0
  %v212 = vadd.f32 %v208, 1.0
  %v213 = vadd.f32 %v209, 1.0
  %v214 = vmul.f32 %v210, 0.5
  %v215 = vmul.f32 %v211, 0.5
  %v216 = vmul.f32 %v212, 0.5
  %v217 = vmul.f32 %v213, 0.5
  %v218 = vmul.f32 %v178, %v214
  %v219 = vmul.f32 %v180, %v215
  %v220 = vmul.f32 %v182, %v216
  %v221 = vmul.f32 %v184, %v217
  %v222 = vpack.c.bf16 %v220, %v218
  %v223 = vpack.c.bf16 %v221, %v219
  %v224 = vld [vmem:[%s3] sm:$0xf]
  %v225 = vld [vmem:[%s3 + $0x4] sm:$0xf]
  %v226 = vld [vmem:[%s3 + $0x8] sm:$0xf]
  %v227 = vld [vmem:[%s3 + $0xc] sm:$0xf]
  %v228 = vld [vmem:[%s3 + $0x10] sm:$0xf]
  %v229 = vld [vmem:[%s3 + $0x14] sm:$0xf]
  %v230 = vld [vmem:[%s3 + $0x18] sm:$0xf]
  %v231 = vld [vmem:[%s3 + $0x1c] sm:$0xf]
  %v232 = vld [vmem:[%s3 + $0x20] sm:$0xf]
  %v233 = vld [vmem:[%s3 + $0x24] sm:$0xf]
  %v234 = vld [vmem:[%s3 + $0x28] sm:$0xf]
  %v235 = vld [vmem:[%s3 + $0x2c] sm:$0xf]
  %v236 = vld [vmem:[%s3 + $0x30] sm:$0xf]
  %v237 = vld [vmem:[%s3 + $0x34] sm:$0xf]
  %v238 = vld [vmem:[%s3 + $0x38] sm:$0xf]
  %v239 = vld [vmem:[%s3 + $0x3c] sm:$0xf]
  %v240 = vld [vmem:[%s3 + $0x40] sm:$0xf]
  %v241 = vld [vmem:[%s3 + $0x44] sm:$0xf]
  %v242 = vld [vmem:[%s3 + $0x48] sm:$0xf]
  %v243 = vld [vmem:[%s3 + $0x4c] sm:$0xf]
  %v244 = vld [vmem:[%s3 + $0x50] sm:$0xf]
  %v245 = vld [vmem:[%s3 + $0x54] sm:$0xf]
  %v246 = vld [vmem:[%s3 + $0x58] sm:$0xf]
  %v247 = vld [vmem:[%s3 + $0x5c] sm:$0xf]
  %v248 = vld [vmem:[%s3 + $0x60] sm:$0xf]
  %v249 = vld [vmem:[%s3 + $0x64] sm:$0xf]
  %v250 = vld [vmem:[%s3 + $0x68] sm:$0xf]
  %v251 = vld [vmem:[%s3 + $0x6c] sm:$0xf]
  %v252 = vld [vmem:[%s3 + $0x70] sm:$0xf]
  %v253 = vld [vmem:[%s3 + $0x74] sm:$0xf]
  %v254 = vld [vmem:[%s3 + $0x78] sm:$0xf]
  %v255 = vld [vmem:[%s3 + $0x7c] sm:$0xf]
  %v256 = vld [vmem:[%s4] sm:$0x1]
  %v258 = vlaneseq
  %v259 = vshrl.u32 %v258, 7
  %v260 = vsub.s32 0, %v259
  %v261 = vrot.slane %v256, %v260
  %v295 = vunpack.c.l.b16 %v224
  %v296 = vunpack.c.l.b16 %v225
  %v297 = vunpack.c.l.b16 %v226
  %v298 = vunpack.c.l.b16 %v227
  %v299 = vunpack.c.l.b16 %v228
  %v300 = vunpack.c.l.b16 %v229
  %v301 = vunpack.c.l.b16 %v230
  %v302 = vunpack.c.l.b16 %v231
  %v303 = vunpack.c.l.b16 %v232
  %v304 = vunpack.c.l.b16 %v233
  %v305 = vunpack.c.l.b16 %v234
  %v306 = vunpack.c.l.b16 %v235
  %v307 = vunpack.c.l.b16 %v236
  %v308 = vunpack.c.l.b16 %v237
  %v309 = vunpack.c.l.b16 %v238
  %v310 = vunpack.c.l.b16 %v239
  %v311 = vunpack.c.l.b16 %v240
  %v312 = vunpack.c.l.b16 %v241
  %v313 = vunpack.c.l.b16 %v242
  %v314 = vunpack.c.l.b16 %v243
  %v315 = vunpack.c.l.b16 %v244
  %v316 = vunpack.c.l.b16 %v245
  %v317 = vunpack.c.l.b16 %v246
  %v318 = vunpack.c.l.b16 %v247
  %v319 = vunpack.c.l.b16 %v248
  %v320 = vunpack.c.l.b16 %v249
  %v321 = vunpack.c.l.b16 %v250
  %v322 = vunpack.c.l.b16 %v251
  %v323 = vunpack.c.l.b16 %v252
  %v324 = vunpack.c.l.b16 %v253
  %v325 = vunpack.c.l.b16 %v254
  %v326 = vunpack.c.l.b16 %v255
  %v327 = vpack.c.b16 %v296, %v295
  %v328 = vpack.c.b16 %v298, %v297
  %v329 = vpack.c.b16 %v300, %v299
  %v330 = vpack.c.b16 %v302, %v301
  %v331 = vpack.c.b16 %v304, %v303
  %v332 = vpack.c.b16 %v306, %v305
  %v333 = vpack.c.b16 %v308, %v307
  %v334 = vpack.c.b16 %v310, %v309
  %v335 = vpack.c.b16 %v312, %v311
  %v336 = vpack.c.b16 %v314, %v313
  %v337 = vpack.c.b16 %v316, %v315
  %v338 = vpack.c.b16 %v318, %v317
  %v339 = vpack.c.b16 %v320, %v319
  %v340 = vpack.c.b16 %v322, %v321
  %v341 = vpack.c.b16 %v324, %v323
  %v342 = vpack.c.b16 %v326, %v325
  %359 = vmatprep.subr.bf16.mxu0 0
  %360 = vmatpush1.bf16.msra.mxu0 %v334
  %361 = vmatprep.subr.bf16.mxu0 0
  %362 = vmatpush1.bf16.msra.mxu0 %v333
  %363 = vmatprep.subr.bf16.mxu0 0
  %364 = vmatpush1.bf16.msra.mxu0 %v332
  %365 = vmatprep.subr.bf16.mxu0 0
  %366 = vmatpush1.bf16.msra.mxu0 %v331
  %367 = vmatprep.subr.bf16.mxu0 0
  %368 = vmatpush1.bf16.msra.mxu0 %v330
  %369 = vmatprep.subr.bf16.mxu0 0
  %370 = vmatpush1.bf16.msra.mxu0 %v329
  %371 = vmatprep.subr.bf16.mxu0 0
  %372 = vmatpush1.bf16.msra.mxu0 %v328
  %373 = vmatprep.subr.bf16.mxu0 0
  %374 = vmatpush1.bf16.msra.mxu0 %v327
  %375 = vmatprep.subr.bf16.mxu0 0
  %376 = vmatpush2.bf16.msra.mxu0 %v342
  %377 = vmatprep.subr.bf16.mxu0 0
  %378 = vmatpush2.bf16.msra.mxu0 %v341
  %379 = vmatprep.subr.bf16.mxu0 0
  %380 = vmatpush2.bf16.msra.mxu0 %v340
  %381 = vmatprep.subr.bf16.mxu0 0
  %382 = vmatpush2.bf16.msra.mxu0 %v339
  %383 = vmatprep.subr.bf16.mxu0 0
  %384 = vmatpush2.bf16.msra.mxu0 %v338
  %385 = vmatprep.subr.bf16.mxu0 0
  %386 = vmatpush2.bf16.msra.mxu0 %v337
  %387 = vmatprep.subr.bf16.mxu0 0
  %388 = vmatpush2.bf16.msra.mxu0 %v336
  %389 = vmatprep.subr.bf16.mxu0 0
  %390 = vmatpush2.bf16.msra.mxu0 %v335
  %391 = vmatprep.mubr.bf16.mxu0 %v223
  %392 = vmatmul.mubr.bf16.gmra.mxu0 %v222
  %v393 = vpop.f32.mrf.mxu0
  %v394 = vadd.f32 %v261, %v393
  %v395 = vpop.f32.mrf.mxu0
  %v396 = vpop.f32.mrf.mxu0
  %v397 = vadd.f32 %v261, %v396
  %v398 = vpop.f32.mrf.mxu0
  %399 = vdwg.mxu0
  %v400 = vunpack.c.l.bf16 %v27
  %v401 = vunpack.c.l.bf16 %v28
  %v402 = vadd.f32 %v394, %v400
  %v403 = vadd.f32 %v397, %v401
  %404 = vadd.xlane.f32.xlu0 %v402
  %v405 = vpop.xlane.xlu0 %404
  %406 = vadd.xlane.f32.xlu0 %v403
  %v407 = vpop.xlane.xlu0 %406
  %v408 = vrcp.pop 128.0
  %v409 = vmul.f32 %v405, %v408
  %v410 = vmul.f32 %v407, %v408
  %v411 = vsub.f32 %v402, %v409
  %v412 = vsub.f32 %v403, %v410
  %v413 = vmul.f32 %v411, %v411
  %v414 = vmul.f32 %v412, %v412
  %415 = vadd.xlane.f32.xlu0 %v413
  %v416 = vpop.xlane.xlu0 %415
  %417 = vadd.xlane.f32.xlu0 %v414
  %v418 = vpop.xlane.xlu0 %417
  %v419 = vmul.f32 %v416, %v408
  %v420 = vmul.f32 %v418, %v408
  %v421 = vadd.f32 %v419, 1e-12
  %v422 = vadd.f32 %v420, 1e-12
  %v423 = vrsqrt.pop %v421
  %v424 = vrsqrt.pop %v422
  %v425 = vmul.f32 %v411, %v423
  %v426 = vmul.f32 %v412, %v424
  %v427 = vld [vmem:[%s5] sm:$0x1]
  %v429 = vlaneseq
  %v430 = vshrl.u32 %v429, 7
  %v431 = vsub.s32 0, %v430
  %v432 = vrot.slane %v427, %v431
  %v434 = vmul.f32 %v425, %v432
  %v435 = vmul.f32 %v426, %v432
  %v436 = vld [vmem:[%s6] sm:$0x1]
  %v438 = vlaneseq
  %v439 = vshrl.u32 %v438, 7
  %v440 = vsub.s32 0, %v439
  %v441 = vrot.slane %v436, %v440
  %v443 = vadd.f32 %v434, %v441
  %v444 = vadd.f32 %v435, %v441
  %v445 = vpack.c.bf16 %v444, %v443
  %v447 = vunpack.c.l.b16 %v445
  %v448 = vunpack.c.h.b16 %v445
  %v449 = vpack.c.b16 %v447, %v447
  %v450 = vpack.c.b16 %v448, %v448
  %453 = vst [vmem:[%s7] sm:$0xf] %v449
  %454 = vst [vmem:[%s7 + $0x4] sm:$0xf] %v450
  // Predicated region
  $region30: #{bert_forward.9} parent=0 // pred_check
    _
  $region31: #{bert_forward.9} parent=0 // pred_check_branch
    %456 = sbr.rel (0) target = $region33
  $region32: #{bert_forward.9} parent=0 // pred_region
    _
  $region33: #{bert_forward.9} parent=0 // pred_fallthru
    _
  // Predicated region
  $region34: #{bert_forward.9} parent=0 // pred_check
    _
  $region35: #{bert_forward.9} parent=0 // pred_check_branch
    %458 = sbr.rel (0) target = $region37
  $region36: #{bert_forward.9} parent=0 // pred_region
    _
  $region37: #{bert_forward.9} parent=0 // pred_fallthru
    _

// kernel: bert_forward.8
$region0: #{bert_forward.8}
  #allocation0 [shape = 'u32[]', space=smem, size = 0x4, offset = 0x4, fixed_abs, tag = 'smem constant byte address 0x4 - core index']
  #allocation1 [shape = 'u32[144,128]{1,0:T(1,128)}', space=vmem, size = 0x12000, scoped, tag = 'internal scratch']
  %s0 = inlined_call_operand.vmem [shape: bf16[2,8,128], index: 0, kind: input, shape index: {}]
  %s1 = inlined_call_operand.vmem [shape: f32[2,1,8], index: 1, kind: input, shape index: {}]
  %s2 = inlined_call_operand.vmem [shape: bf16[128,384], index: 2, kind: input, shape index: {}]
  %s3 = inlined_call_operand.vmem [shape: f32[1,384], index: 3, kind: input, shape index: {}]
  %s4 = inlined_call_operand.vmem [shape: bf16[128,128], index: 4, kind: input, shape index: {}]
  %s5 = inlined_call_operand.vmem [shape: f32[1,128], index: 5, kind: input, shape index: {}]
  %s6 = inlined_call_operand.vmem [shape: f32[1,128], index: 6, kind: input, shape index: {}]
  %s7 = inlined_call_operand.vmem [shape: f32[1,128], index: 7, kind: input, shape index: {}]
  %s8 = inlined_call_operand.vmem [shape: bf16[2,8,128], index: 8, kind: output, shape index: {}]
  %s9 = sld [smem:[#allocation0]]
  $region65: #{bert_forward.8} parent=0
    _
  %s11 = ssub.s32 1, %s9
  %s12 = scalar_select 0, %s11, %s9
  loop: start=0, step=1, limit=4
  $region2: #{bert_forward.8} parent=0 // loop_pre_header
    _
  $region3: #{bert_forward.8} parent=0 // loop_header
    %s14 = sphi 0, %s18
    %p15 = scmp.ge.s32.totalorder %s14, 4
    %s24 = sphi 0, %s26
    %s27 = sphi 0, %s24
    %s28 = sphi 0, %s27
    %s44 = sphi 0, %s28
    %s50 = sphi 0, %s52
    %s53 = sphi 0, %s50
    %s54 = sphi 0, %s53
    %s70 = sphi 0, %s54
    %s74 = sphi 0, %s74
    %s76 = sphi 0, %s74
    %s77 = sphi 0, %s76
    %s91 = sphi 0, %s77
    %s95 = sphi 0, %s95
    %s97 = sphi 0, %s95
    %s98 = sphi 0, %s97
    %s112 = sphi 0, %s98
    %s116 = sphi 0, %s116
    %s118 = sphi 0, %s116
    %s119 = sphi 0, %s118
    %s133 = sphi 0, %s119
    %s137 = sphi 0, %s137
    %s139 = sphi 0, %s137
    %s140 = sphi 0, %s139
    %s154 = sphi 0, %s140
    %s158 = sphi 0, %s158
    %s160 = sphi 0, %s158
    %s161 = sphi 0, %s160
    %s175 = sphi 0, %s161
    %s179 = sphi 0, %s179
    %s181 = sphi 0, %s179
    %s182 = sphi 0, %s181
    %s196 = sphi 0, %s182
    %s202 = sphi 0, %s204
    %s205 = sphi 0, %s202
    %s206 = sphi 0, %s205
    %s222 = sphi 0, %s206
  $region4: #{bert_forward.8} parent=0 // loop_header_branch
    %17 = sbr.rel (%p15) target = $region8
  $region5: #{bert_forward.8} parent=0 // loop_body
    %s19 = ssub.s32 %s14, 1
    %s20 = ssub.s32 %s14, 2
    %s21 = sadd.s32 %s14, 1
    %s22 = ssub.s32 %s14, %s21
    %p23 = scmp.eq.s32.totalorder %s22, 0
    %s25 = sadd.s32 %s24, 1
    %s26 = scalar_select %p23, %s24, %s25
    %p29 = pneg %p23
    %p30 = scmp.eq.s32.totalorder %s14, 1
    %p31 = por %p29, %p30
    %p32 = scmp.ne.s32.totalorder %s24, %s27
    %p33 = scmp.eq.s32.totalorder %s14, 0
    %p34 = por %p32, %p33
    %p35 = scmp.ne.s32.totalorder %s24, %s27
    %p36 = scmp.eq.s32.totalorder %s19, 1
    %p37 = por %p35, %p36
    %p38 = scmp.ne.s32.totalorder %s27, %s28
    %p39 = scmp.eq.s32.totalorder %s19, 0
    %p40 = por %p38, %p39
    %p41 = scmp.ne.s32.totalorder %s27, %s28
    %p42 = scmp.eq.s32.totalorder %s20, 1
    %p43 = por %p41, %p42
    %p45 = scmp.ne.s32.totalorder %s28, %s44
    %p46 = scmp.eq.s32.totalorder %s20, 0
    %p47 = por %p45, %p46
    %s48 = ssub.s32 %s14, %s21
    %p49 = scmp.eq.s32.totalorder %s48, 0
    %s51 = sadd.s32 %s50, 1
    %s52 = scalar_select %p49, %s50, %s51
    %p55 = pneg %p49
    %p56 = scmp.eq.s32.totalorder %s14, 1
    %p57 = por %p55, %p56
    %p58 = scmp.ne.s32.totalorder %s50, %s53
    %p59 = scmp.eq.s32.totalorder %s14, 0
    %p60 = por %p58, %p59
    %p61 = scmp.ne.s32.totalorder %s50, %s53
    %p62 = scmp.eq.s32.totalorder %s19, 1
    %p63 = por %p61, %p62
    %p64 = scmp.ne.s32.totalorder %s53, %s54
    %p65 = scmp.eq.s32.totalorder %s19, 0
    %p66 = por %p64, %p65
    %p67 = scmp.ne.s32.totalorder %s53, %s54
    %p68 = scmp.eq.s32.totalorder %s20, 1
    %p69 = por %p67, %p68
    %p71 = scmp.ne.s32.totalorder %s54, %s70
    %p72 = scmp.eq.s32.totalorder %s20, 0
    %p73 = por %p71, %p72
    %s75 = sadd.s32 %s74, 1
    %p78 = scmp.eq.s32.totalorder %s14, 1
    %p79 = scmp.ne.s32.totalorder %s74, %s76
    %p80 = scmp.eq.s32.totalorder %s14, 0
    %p81 = por %p79, %p80
    %p82 = scmp.ne.s32.totalorder %s74, %s76
    %p83 = scmp.eq.s32.totalorder %s19, 1
    %p84 = por %p82, %p83
    %p85 = scmp.ne.s32.totalorder %s76, %s77
    %p86 = scmp.eq.s32.totalorder %s19, 0
    %p87 = por %p85, %p86
    %p88 = scmp.ne.s32.totalorder %s76, %s77
    %p89 = scmp.eq.s32.totalorder %s20, 1
    %p90 = por %p88, %p89
    %p92 = scmp.ne.s32.totalorder %s77, %s91
    %p93 = scmp.eq.s32.totalorder %s20, 0
    %p94 = por %p92, %p93
    %s96 = sadd.s32 %s95, 1
    %p99 = scmp.eq.s32.totalorder %s14, 1
    %p100 = scmp.ne.s32.totalorder %s95, %s97
    %p101 = scmp.eq.s32.totalorder %s14, 0
    %p102 = por %p100, %p101
    %p103 = scmp.ne.s32.totalorder %s95, %s97
    %p104 = scmp.eq.s32.totalorder %s19, 1
    %p105 = por %p103, %p104
    %p106 = scmp.ne.s32.totalorder %s97, %s98
    %p107 = scmp.eq.s32.totalorder %s19, 0
    %p108 = por %p106, %p107
    %p109 = scmp.ne.s32.totalorder %s97, %s98
    %p110 = scmp.eq.s32.totalorder %s20, 1
    %p111 = por %p109, %p110
    %p113 = scmp.ne.s32.totalorder %s98, %s112
    %p114 = scmp.eq.s32.totalorder %s20, 0
    %p115 = por %p113, %p114
    %s117 = sadd.s32 %s116, 1
    %p120 = scmp.eq.s32.totalorder %s14, 1
    %p121 = scmp.ne.s32.totalorder %s116, %s118
    %p122 = scmp.eq.s32.totalorder %s14, 0
    %p123 = por %p121, %p122
    %p124 = scmp.ne.s32.totalorder %s116, %s118
    %p125 = scmp.eq.s32.totalorder %s19, 1
    %p126 = por %p124, %p125
    %p127 = scmp.ne.s32.totalorder %s118, %s119
    %p128 = scmp.eq.s32.totalorder %s19, 0
    %p129 = por %p127, %p128
    %p130 = scmp.ne.s32.totalorder %s118, %s119
    %p131 = scmp.eq.s32.totalorder %s20, 1
    %p132 = por %p130, %p131
    %p134 = scmp.ne.s32.totalorder %s119, %s133
    %p135 = scmp.eq.s32.totalorder %s20, 0
    %p136 = por %p134, %p135
    %s138 = sadd.s32 %s137, 1
    %p141 = scmp.eq.s32.totalorder %s14, 1
    %p142 = scmp.ne.s32.totalorder %s137, %s139
    %p143 = scmp.eq.s32.totalorder %s14, 0
    %p144 = por %p142, %p143
    %p145 = scmp.ne.s32.totalorder %s137, %s139
    %p146 = scmp.eq.s32.totalorder %s19, 1
    %p147 = por %p145, %p146
    %p148 = scmp.ne.s32.totalorder %s139, %s140
    %p149 = scmp.eq.s32.totalorder %s19, 0
    %p150 = por %p148, %p149
    %p151 = scmp.ne.s32.totalorder %s139, %s140
    %p152 = scmp.eq.s32.totalorder %s20, 1
    %p153 = por %p151, %p152
    %p155 = scmp.ne.s32.totalorder %s140, %s154
    %p156 = scmp.eq.s32.totalorder %s20, 0
    %p157 = por %p155, %p156
    %s159 = sadd.s32 %s158, 1
    %p162 = scmp.eq.s32.totalorder %s14, 1
    %p163 = scmp.ne.s32.totalorder %s158, %s160
    %p164 = scmp.eq.s32.totalorder %s14, 0
    %p165 = por %p163, %p164
    %p166 = scmp.ne.s32.totalorder %s158, %s160
    %p167 = scmp.eq.s32.totalorder %s19, 1
    %p168 = por %p166, %p167
    %p169 = scmp.ne.s32.totalorder %s160, %s161
    %p170 = scmp.eq.s32.totalorder %s19, 0
    %p171 = por %p169, %p170
    %p172 = scmp.ne.s32.totalorder %s160, %s161
    %p173 = scmp.eq.s32.totalorder %s20, 1
    %p174 = por %p172, %p173
    %p176 = scmp.ne.s32.totalorder %s161, %s175
    %p177 = scmp.eq.s32.totalorder %s20, 0
    %p178 = por %p176, %p177
    %s180 = sadd.s32 %s179, 1
    %p183 = scmp.eq.s32.totalorder %s14, 1
    %p184 = scmp.ne.s32.totalorder %s179, %s181
    %p185 = scmp.eq.s32.totalorder %s14, 0
    %p186 = por %p184, %p185
    %p187 = scmp.ne.s32.totalorder %s179, %s181
    %p188 = scmp.eq.s32.totalorder %s19, 1
    %p189 = por %p187, %p188
    %p190 = scmp.ne.s32.totalorder %s181, %s182
    %p191 = scmp.eq.s32.totalorder %s19, 0
    %p192 = por %p190, %p191
    %p193 = scmp.ne.s32.totalorder %s181, %s182
    %p194 = scmp.eq.s32.totalorder %s20, 1
    %p195 = por %p193, %p194
    %p197 = scmp.ne.s32.totalorder %s182, %s196
    %p198 = scmp.eq.s32.totalorder %s20, 0
    %p199 = por %p197, %p198
    %s200 = ssub.s32 %s14, %s21
    %p201 = scmp.eq.s32.totalorder %s200, 0
    %s203 = sadd.s32 %s202, 1
    %s204 = scalar_select %p201, %s202, %s203
    %p207 = pneg %p201
    %p208 = scmp.eq.s32.totalorder %s14, 1
    %p209 = por %p207, %p208
    %p210 = scmp.ne.s32.totalorder %s202, %s205
    %p211 = scmp.eq.s32.totalorder %s14, 0
    %p212 = por %p210, %p211
    %p213 = scmp.ne.s32.totalorder %s202, %s205
    %p214 = scmp.eq.s32.totalorder %s19, 1
    %p215 = por %p213, %p214
    %p216 = scmp.ne.s32.totalorder %s205, %s206
    %p217 = scmp.eq.s32.totalorder %s19, 0
    %p218 = por %p216, %p217
    %p219 = scmp.ne.s32.totalorder %s205, %s206
    %p220 = scmp.eq.s32.totalorder %s20, 1
    %p221 = por %p219, %p220
    %p223 = scmp.ne.s32.totalorder %s206, %s222
    %p224 = scmp.eq.s32.totalorder %s20, 0
    %p225 = por %p223, %p224
    %p226 = scmp.le.s32.totalorder 1, %s14
    %p227 = scmp.lt.s32.totalorder %s14, 3
    %p228 = pnand %p226, %p227
    %p229 = pneg %p228
    // Predicated region
    $region9: #{bert_forward.8} parent=5 // pred_check
      _
    $region10: #{bert_forward.8} parent=5 // pred_check_branch
      %231 = sbr.rel (%p228) target = $region12
    $region11: #{bert_forward.8} parent=5 // pred_region
      %s232 = ssub.s32 %s14, 1
      // Predicated region
      $region13: #{bert_forward.8} parent=11 // pred_check
        %p233 = pneg %p87
      $region14: #{bert_forward.8} parent=11 // pred_check_branch
        %235 = sbr.rel (%p233) target = $region16
      $region15: #{bert_forward.8} parent=11 // pred_region
        _
      $region16: #{bert_forward.8} parent=11 // pred_fallthru
        _
      // Predicated region
      $region17: #{bert_forward.8} parent=11 // pred_check
        %p236 = pneg %p108
      $region18: #{bert_forward.8} parent=11 // pred_check_branch
        %238 = sbr.rel (%p236) target = $region20
      $region19: #{bert_forward.8} parent=11 // pred_region
        _
      $region20: #{bert_forward.8} parent=11 // pred_fallthru
        _
      // Predicated region
      $region21: #{bert_forward.8} parent=11 // pred_check
        %p239 = pneg %p129
      $region22: #{bert_forward.8} parent=11 // pred_check_branch
        %241 = sbr.rel (%p239) target = $region24
      $region23: #{bert_forward.8} parent=11 // pred_region
        _
      $region24: #{bert_forward.8} parent=11 // pred_fallthru
        _
      // Predicated region
      $region25: #{bert_forward.8} parent=11 // pred_check
        %p242 = pneg %p150
      $region26: #{bert_forward.8} parent=11 // pred_check_branch
        %244 = sbr.rel (%p242) target = $region28
      $region27: #{bert_forward.8} parent=11 // pred_region
        _
      $region28: #{bert_forward.8} parent=11 // pred_fallthru
        _
      // Predicated region
      $region29: #{bert_forward.8} parent=11 // pred_check
        %p245 = pneg %p171
      $region30: #{bert_forward.8} parent=11 // pred_check_branch
        %247 = sbr.rel (%p245) target = $region32
      $region31: #{bert_forward.8} parent=11 // pred_region
        _
      $region32: #{bert_forward.8} parent=11 // pred_fallthru
        _
      // Predicated region
      $region33: #{bert_forward.8} parent=11 // pred_check
        %p248 = pneg %p192
      $region34: #{bert_forward.8} parent=11 // pred_check_branch
        %250 = sbr.rel (%p248) target = $region36
      $region35: #{bert_forward.8} parent=11 // pred_region
        _
      $region36: #{bert_forward.8} parent=11 // pred_fallthru
        _
    $region12: #{bert_forward.8} parent=5 // pred_fallthru
      _
    %p251 = scmp.lt.s32.totalorder %s14, 2
    // Predicated region
    $region37: #{bert_forward.8} parent=5 // pred_check
      %p252 = pneg %p251
    $region38: #{bert_forward.8} parent=5 // pred_check_branch
      %254 = sbr.rel (%p252) target = $region40
    $region39: #{bert_forward.8} parent=5 // pred_region
      // Predicated region
      $region41: #{bert_forward.8} parent=39 // pred_check
        %p255 = pneg %p34
      $region42: #{bert_forward.8} parent=39 // pred_check_branch
        %257 = sbr.rel (%p255) target = $region44
      $region43: #{bert_forward.8} parent=39 // pred_region
        %p258 = scmp.lt.s32.totalorder %s14, 1
        %s259 = scalar_select %p258, %s14, 1
        %s260 = smul.addr %s259, 4
        %s261 = scalar_lea.vmem %s0, %s260
      $region44: #{bert_forward.8} parent=39 // pred_fallthru
        _
      // Predicated region
      $region45: #{bert_forward.8} parent=39 // pred_check
        %p262 = pneg %p60
      $region46: #{bert_forward.8} parent=39 // pred_check_branch
        %264 = sbr.rel (%p262) target = $region48
      $region47: #{bert_forward.8} parent=39 // pred_region
        %p265 = scmp.lt.s32.totalorder %s14, 1
        %s266 = scalar_select %p265, %s14, 1
        %s267 = scalar_lea.vmem %s1, %s266
      $region48: #{bert_forward.8} parent=39 // pred_fallthru
        _
    $region40: #{bert_forward.8} parent=5 // pred_fallthru
      _
    %p268 = scmp.le.s32.totalorder 1, %s14
    %p269 = scmp.lt.s32.totalorder %s14, 3
    %p270 = pnand %p268, %p269
    %p271 = pneg %p270
    // Predicated region
    $region49: #{bert_forward.8} parent=5 // pred_check
      _
    $region50: #{bert_forward.8} parent=5 // pred_check_branch
      %273 = sbr.rel (%p270) target = $region52
    $region51: #{bert_forward.8} parent=5 // pred_region
      %s274 = ssub.s32 %s14, 1
      %p275 = scmp.lt.s32.totalorder %s19, 1
      %s276 = scalar_select %p275, %s19, 1
      %s277 = smul.addr %s276, 4
      %s278 = scalar_lea.vmem %s0, %s277
      %p279 = pneg %p40
      %p280 = pneg %p37
      %p281 = scmp.lt.s32.totalorder %s19, 1
      %s282 = scalar_select %p281, %s19, 1
      %s283 = scalar_lea.vmem %s1, %s282
      %p284 = pneg %p66
      %p285 = pneg %p63
      %p286 = pneg %p87
      %p287 = pneg %p84
      %p288 = pneg %p108
      %p289 = pneg %p105
      %p290 = pneg %p129
      %p291 = pneg %p126
      %p292 = pneg %p150
      %p293 = pneg %p147
      %p294 = pneg %p171
      %p295 = pneg %p168
      %p296 = pneg %p192
      %p297 = pneg %p189
      %p298 = pneg %p218
      %p299 = pneg %p215
      %p300 = scmp.lt.s32.totalorder %s19, 1
      %s301 = scalar_select %p300, %s19, 1
      %s302 = smul.addr %s301, 4
      %s303 = scalar_lea.vmem %s8, %s302
      %p304 = scmp.lt.s32.totalorder %s19, 1
      %s305 = scalar_select %p304, %s19, 1
      %s306 = smul.addr %s305, 4
      %s307 = scalar_lea.vmem %s0, %s306
      %p308 = scmp.lt.s32.totalorder %s19, 1
      %s309 = scalar_select %p308, %s19, 1
      %s310 = scalar_lea.vmem %s1, %s309
      %p311 = scmp.lt.s32.totalorder %s19, 1
      %s312 = scalar_select %p311, %s19, 1
      %s313 = smul.addr %s312, 4
      %s314 = scalar_lea.vmem %s8, %s313
      %v316 = vld [vmem:[%s307] sm:$0xf]
      %v317 = vld [vmem:[%s2] sm:$0xff]
      %v318 = vld [vmem:[%s2 + $0x8] sm:$0xf]
      %v319 = vld [vmem:[%s2 + $0xc] sm:$0xff]
      %v320 = vld [vmem:[%s2 + $0x14] sm:$0xf]
      %v321 = vld [vmem:[%s2 + $0x18] sm:$0xff]
      %v322 = vld [vmem:[%s2 + $0x20] sm:$0xf]
      %v323 = vld [vmem:[%s2 + $0x24] sm:$0xff]
      %v324 = vld [vmem:[%s2 + $0x2c] sm:$0xf]
      %v325 = vld [vmem:[%s2 + $0x30] sm:$0xff]
      %v326 = vld [vmem:[%s2 + $0x38] sm:$0xf]
      %v327 = vld [vmem:[%s2 + $0x3c] sm:$0xff]
      %v328 = vld [vmem:[%s2 + $0x44] sm:$0xf]
      %v329 = vld [vmem:[%s2 + $0x48] sm:$0xff]
      %v330 = vld [vmem:[%s2 + $0x50] sm:$0xf]
      %v331 = vld [vmem:[%s2 + $0x54] sm:$0xff]
      %v332 = vld [vmem:[%s2 + $0x5c] sm:$0xf]
      %v333 = vld [vmem:[%s2 + $0x60] sm:$0xff]
      %v334 = vld [vmem:[%s2 + $0x68] sm:$0xf]
      %v335 = vld [vmem:[%s2 + $0x6c] sm:$0xff]
      %v336 = vld [vmem:[%s2 + $0x74] sm:$0xf]
      %v337 = vld [vmem:[%s2 + $0x78] sm:$0xff]
      %v338 = vld [vmem:[%s2 + $0x80] sm:$0xf]
      %v339 = vld [vmem:[%s2 + $0x84] sm:$0xff]
      %v340 = vld [vmem:[%s2 + $0x8c] sm:$0xf]
      %v341 = vld [vmem:[%s2 + $0x90] sm:$0xff]
      %v342 = vld [vmem:[%s2 + $0x98] sm:$0xf]
      %v343 = vld [vmem:[%s2 + $0x9c] sm:$0xff]
      %v344 = vld [vmem:[%s2 + $0xa4] sm:$0xf]
      %v345 = vld [vmem:[%s2 + $0xa8] sm:$0xff]
      %v346 = vld [vmem:[%s2 + $0xb0] sm:$0xf]
      %v347 = vld [vmem:[%s2 + $0xb4] sm:$0xff]
      %v348 = vld [vmem:[%s2 + $0xbc] sm:$0xf]
      %v349 = vld [vmem:[%s3] sm:$0x7]
      %v351 = vlaneseq
      %v352 = vshrl.u32 %v351, 7
      %v353 = vsub.s32 0, %v352
      %v354 = vrot.slane %v349, %v353
      %v355 = vlaneseq
      %v356 = vshrl.u32 %v355, 7
      %v357 = vsub.s32 1, %v356
      %v358 = vrot.slane %v349, %v357
      %v359 = vlaneseq
      %v360 = vshrl.u32 %v359, 7
      %v361 = vsub.s32 2, %v360
      %v362 = vrot.slane %v349, %v361
      %v398 = vunpack.c.l.b16 %v317
      %v399 = vunpack.c.h.b16 %v317
      %v400 = vunpack.c.l.b16 %v318
      %v401 = vunpack.c.l.b16 %v319
      %v402 = vunpack.c.h.b16 %v319
      %v403 = vunpack.c.l.b16 %v320
      %v404 = vunpack.c.l.b16 %v321
      %v405 = vunpack.c.h.b16 %v321
      %v406 = vunpack.c.l.b16 %v322
      %v407 = vunpack.c.l.b16 %v323
      %v408 = vunpack.c.h.b16 %v323
      %v409 = vunpack.c.l.b16 %v324
      %v410 = vunpack.c.l.b16 %v325
      %v411 = vunpack.c.h.b16 %v325
      %v412 = vunpack.c.l.b16 %v326
      %v413 = vunpack.c.l.b16 %v327
      %v414 = vunpack.c.h.b16 %v327
      %v415 = vunpack.c.l.b16 %v328
      %v416 = vunpack.c.l.b16 %v329
      %v417 = vunpack.c.h.b16 %v329
      %v418 = vunpack.c.l.b16 %v330
      %v419 = vunpack.c.l.b16 %v331
      %v420 = vunpack.c.h.b16 %v331
      %v421 = vunpack.c.l.b16 %v332
      %v422 = vunpack.c.l.b16 %v333
      %v423 = vunpack.c.h.b16 %v333
      %v424 = vunpack.c.l.b16 %v334
      %v425 = vunpack.c.l.b16 %v335
      %v426 = vunpack.c.h.b16 %v335
      %v427 = vunpack.c.l.b16 %v336
      %v428 = vunpack.c.l.b16 %v337
      %v429 = vunpack.c.h.b16 %v337
      %v430 = vunpack.c.l.b16 %v338
      %v431 = vunpack.c.l.b16 %v339
      %v432 = vunpack.c.h.b16 %v339
      %v433 = vunpack.c.l.b16 %v340
      %v434 = vunpack.c.l.b16 %v341
      %v435 = vunpack.c.h.b16 %v341
      %v436 = vunpack.c.l.b16 %v342
      %v437 = vunpack.c.l.b16 %v343
      %v438 = vunpack.c.h.b16 %v343
      %v439 = vunpack.c.l.b16 %v344
      %v440 = vunpack.c.l.b16 %v345
      %v441 = vunpack.c.h.b16 %v345
      %v442 = vunpack.c.l.b16 %v346
      %v443 = vunpack.c.l.b16 %v347
      %v444 = vunpack.c.h.b16 %v347
      %v445 = vunpack.c.l.b16 %v348
      %v446 = vpack.c.b16 %v401, %v398
      %v447 = vpack.c.b16 %v402, %v399
      %v448 = vpack.c.b16 %v403, %v400
      %v449 = vpack.c.b16 %v407, %v404
      %v450 = vpack.c.b16 %v408, %v405
      %v451 = vpack.c.b16 %v409, %v406
      %v452 = vpack.c.b16 %v413, %v410
      %v453 = vpack.c.b16 %v414, %v411
      %v454 = vpack.c.b16 %v415, %v412
      %v455 = vpack.c.b16 %v419, %v416
      %v456 = vpack.c.b16 %v420, %v417
      %v457 = vpack.c.b16 %v421, %v418
      %v458 = vpack.c.b16 %v425, %v422
      %v459 = vpack.c.b16 %v426, %v423
      %v460 = vpack.c.b16 %v427, %v424
      %v461 = vpack.c.b16 %v431, %v428
      %v462 = vpack.c.b16 %v432, %v429
      %v463 = vpack.c.b16 %v433, %v430
      %v464 = vpack.c.b16 %v437, %v434
      %v465 = vpack.c.b16 %v438, %v435
      %v466 = vpack.c.b16 %v439, %v436
      %v467 = vpack.c.b16 %v443, %v440
      %v468 = vpack.c.b16 %v444, %v441
      %v469 = vpack.c.b16 %v445, %v442
      %494 = vmatprep.subr.bf16.mxu0 %v468
      %495 = vmatpush1.bf16.msra.mxu0 %v467
      %496 = vmatprep.subr.bf16.mxu0 %v465
      %497 = vmatpush1.bf16.msra.mxu0 %v464
      %498 = vmatprep.subr.bf16.mxu0 %v462
      %499 = vmatpush1.bf16.msra.mxu0 %v461
      %500 = vmatprep.subr.bf16.mxu0 %v459
      %501 = vmatpush1.bf16.msra.mxu0 %v458
      %502 = vmatprep.subr.bf16.mxu0 %v456
      %503 = vmatpush1.bf16.msra.mxu0 %v455
      %504 = vmatprep.subr.bf16.mxu0 %v453
      %505 = vmatpush1.bf16.msra.mxu0 %v452
      %506 = vmatprep.subr.bf16.mxu0 %v450
      %507 = vmatpush1.bf16.msra.mxu0 %v449
      %508 = vmatprep.subr.bf16.mxu0 %v447
      %509 = vmatpush1.bf16.msra.mxu0 %v446
      %510 = vmatprep.subr.bf16.mxu0 0
      %511 = vmatpush2.bf16.msra.mxu0 0
      %512 = vmatprep.subr.bf16.mxu0 0
      %513 = vmatpush2.bf16.msra.mxu0 0
      %514 = vmatprep.subr.bf16.mxu0 0
      %515 = vmatpush2.bf16.msra.mxu0 0
      %516 = vmatprep.subr.bf16.mxu0 0
      %517 = vmatpush2.bf16.msra.mxu0 0
      %518 = vmatprep.subr.bf16.mxu0 0
      %519 = vmatpush2.bf16.msra.mxu0 0
      %520 = vmatprep.subr.bf16.mxu0 0
      %521 = vmatpush2.bf16.msra.mxu0 0
      %522 = vmatprep.subr.bf16.mxu0 0
      %523 = vmatpush2.bf16.msra.mxu0 0
      %524 = vmatprep.subr.bf16.mxu0 0
      %525 = vmatpush2.bf16.msra.mxu0 0
      %526 = vmatprep.mubr.bf16.mxu0 0
      %527 = vmatmul.mubr.bf16.gmra.mxu0 %v316
      %v528 = vpop.f32.mrf.mxu0
      %v529 = vadd.f32 %v354, %v528
      %v530 = vpop.f32.mrf.mxu0
      %v531 = vadd.f32 %v358, %v530
      %v532 = vpop.f32.mrf.mxu0
      %v533 = vpop.f32.mrf.mxu0
      %534 = vdwg.mxu0
      %535 = vmatprep.subr.bf16.mxu0 0
      %536 = vmatpush1.bf16.msra.mxu0 %v469
      %537 = vmatprep.subr.bf16.mxu0 0
      %538 = vmatpush1.bf16.msra.mxu0 %v466
      %539 = vmatprep.subr.bf16.mxu0 0
      %540 = vmatpush1.bf16.msra.mxu0 %v463
      %541 = vmatprep.subr.bf16.mxu0 0
      %542 = vmatpush1.bf16.msra.mxu0 %v460
      %543 = vmatprep.subr.bf16.mxu0 0
      %544 = vmatpush1.bf16.msra.mxu0 %v457
      %545 = vmatprep.subr.bf16.mxu0 0
      %546 = vmatpush1.bf16.msra.mxu0 %v454
      %547 = vmatprep.subr.bf16.mxu0 0
      %548 = vmatpush1.bf16.msra.mxu0 %v451
      %549 = vmatprep.subr.bf16.mxu0 0
      %550 = vmatpush1.bf16.msra.mxu0 %v448
      %551 = vmatprep.subr.bf16.mxu0 0
      %552 = vmatpush2.bf16.msra.mxu0 0
      %553 = vmatprep.subr.bf16.mxu0 0
      %554 = vmatpush2.bf16.msra.mxu0 0
      %555 = vmatprep.subr.bf16.mxu0 0
      %556 = vmatpush2.bf16.msra.mxu0 0
      %557 = vmatprep.subr.bf16.mxu0 0
      %558 = vmatpush2.bf16.msra.mxu0 0
      %559 = vmatprep.subr.bf16.mxu0 0
      %560 = vmatpush2.bf16.msra.mxu0 0
      %561 = vmatprep.subr.bf16.mxu0 0
      %562 = vmatpush2.bf16.msra.mxu0 0
      %563 = vmatprep.subr.bf16.mxu0 0
      %564 = vmatpush2.bf16.msra.mxu0 0
      %565 = vmatprep.subr.bf16.mxu0 0
      %566 = vmatpush2.bf16.msra.mxu0 0
      %567 = vmatprep.mubr.bf16.mxu0 0
      %568 = vmatmul.mubr.bf16.gmra.mxu0 %v316
      %v569 = vpop.f32.mrf.mxu0
      %v570 = vadd.f32 %v362, %v569
      %v571 = vpop.f32.mrf.mxu0
      %v572 = vpop.f32.mrf.mxu0
      %v573 = vpop.f32.mrf.mxu0
      %574 = vdwg.mxu0
      %v575 = vld [vmem:[%s310] sm:$0x1]
      %v577 = vlaneseq
      %v578 = vshrl.u32 %v577, 7
      %v579 = vsub.s32 0, %v578
      %v580 = vrot.slane %v575, %v579
      %v582 = vpack.c.bf16 %v529, %v529
      %v583 = vpack.c.bf16 %v531, %v531
      %v584 = vpack.c.bf16 %v570, %v570
      %vm585 = vcmask 261120
      %v587 = vsel %vm585, %v582, 0
      %v590 = vsel %vm585, %v583, 0
      %592 = vmatprep.subr.bf16.mxu0 0
      %593 = vmatpush1.bf16.xpose.msra.mxu0 0
      %594 = vmatprep.subr.bf16.mxu0 0
      %595 = vmatpush1.bf16.xpose.msra.mxu0 0
      %596 = vmatprep.subr.bf16.mxu0 0
      %597 = vmatpush1.bf16.xpose.msra.mxu0 0
      %598 = vmatprep.subr.bf16.mxu0 0
      %599 = vmatpush1.bf16.xpose.msra.mxu0 0
      %600 = vmatprep.subr.bf16.mxu0 0
      %601 = vmatpush1.bf16.xpose.msra.mxu0 0
      %602 = vmatprep.subr.bf16.mxu0 0
      %603 = vmatpush1.bf16.xpose.msra.mxu0 0
      %604 = vmatprep.subr.bf16.mxu0 0
      %605 = vmatpush1.bf16.xpose.msra.mxu0 0
      %606 = vmatprep.subr.bf16.mxu0 0
      %607 = vmatpush1.bf16.xpose.msra.mxu0 %v590
      %608 = vmatprep.subr.bf16.mxu0 0
      %609 = vmatpush2.bf16.xpose.msra.mxu0 0
      %610 = vmatprep.subr.bf16.mxu0 0
      %611 = vmatpush2.bf16.xpose.msra.mxu0 0
      %612 = vmatprep.subr.bf16.mxu0 0
      %613 = vmatpush2.bf16.xpose.msra.mxu0 0
      %614 = vmatprep.subr.bf16.mxu0 0
      %615 = vmatpush2.bf16.xpose.msra.mxu0 0
      %616 = vmatprep.subr.bf16.mxu0 0
      %617 = vmatpush2.bf16.xpose.msra.mxu0 0
      %618 = vmatprep.subr.bf16.mxu0 0
      %619 = vmatpush2.bf16.xpose.msra.mxu0 0
      %620 = vmatprep.subr.bf16.mxu0 0
      %621 = vmatpush2.bf16.xpose.msra.mxu0 0
      %622 = vmatprep.subr.bf16.mxu0 0
      %623 = vmatpush2.bf16.xpose.msra.mxu0 0
      %624 = vmatprep.mubr.bf16.mxu0 0
      %625 = vmatmul.mubr.bf16.gmra.mxu0 %v587
      %v626 = vpop.f32.mrf.mxu0
      %v627 = vadd.f32 0.0, %v626
      %v628 = vpop.f32.mrf.mxu0
      %v629 = vpop.f32.mrf.mxu0
      %v630 = vpop.f32.mrf.mxu0
      %631 = vdwg.mxu0
      %v632 = vmul.f32 %v627, 0.17677669
      %v633 = vadd.f32 %v632, %v580
      %vm634 = vcmask 64512
      %v635 = vsel %vm634, %v633, -inf
      %636 = vmax.xlane.f32.xlu0 %v635
      %v637 = vpop.xlane.xlu0 %636
      %v638 = vsub.f32 %v633, %v637
      %v639 = vmul.f32 %v638, 1.442695
      %v640 = vpow.pop %v639
      %v641 = vsel %vm634, %v640, 0.0
      %642 = vadd.xlane.f32.xlu0 %v641
      %v643 = vpop.xlane.xlu0 %642
      %v644 = vrcp.pop %v643
      %v645 = vmul.f32 %v640, %v644
      %v646 = vpack.c.bf16 %v645, %v645
      %v648 = vsel %vm634, %v646, 0
      %vm650 = vcmask 1043456
      %v652 = vsel %vm650, %v584, 0
      %654 = vmatprep.subr.bf16.mxu0 0
      %655 = vmatpush1.bf16.msra.mxu0 0
      %656 = vmatprep.subr.bf16.mxu0 0
      %657 = vmatpush1.bf16.msra.mxu0 0
      %658 = vmatprep.subr.bf16.mxu0 0
      %659 = vmatpush1.bf16.msra.mxu0 0
      %660 = vmatprep.subr.bf16.mxu0 0
      %661 = vmatpush1.bf16.msra.mxu0 0
      %662 = vmatprep.subr.bf16.mxu0 0
      %663 = vmatpush1.bf16.msra.mxu0 0
      %664 = vmatprep.subr.bf16.mxu0 0
      %665 = vmatpush1.bf16.msra.mxu0 0
      %666 = vmatprep.subr.bf16.mxu0 0
      %667 = vmatpush1.bf16.msra.mxu0 0
      %668 = vmatprep.subr.bf16.mxu0 0
      %669 = vmatpush1.bf16.msra.mxu0 %v652
      %670 = vmatprep.subr.bf16.mxu0 0
      %671 = vmatpush2.bf16.msra.mxu0 0
      %672 = vmatprep.subr.bf16.mxu0 0
      %673 = vmatpush2.bf16.msra.mxu0 0
      %674 = vmatprep.subr.bf16.mxu0 0
      %675 = vmatpush2.bf16.msra.mxu0 0
      %676 = vmatprep.subr.bf16.mxu0 0
      %677 = vmatpush2.bf16.msra.mxu0 0
      %678 = vmatprep.subr.bf16.mxu0 0
      %679 = vmatpush2.bf16.msra.mxu0 0
      %680 = vmatprep.subr.bf16.mxu0 0
      %681 = vmatpush2.bf16.msra.mxu0 0
      %682 = vmatprep.subr.bf16.mxu0 0
      %683 = vmatpush2.bf16.msra.mxu0 0
      %684 = vmatprep.subr.bf16.mxu0 0
      %685 = vmatpush2.bf16.msra.mxu0 0
      %686 = vmatprep.mubr.bf16.mxu0 0
      %687 = vmatmul.mubr.bf16.gmra.mxu0 %v648
      %v688 = vpop.f32.mrf.mxu0
      %v689 = vadd.f32 0.0, %v688
      %v690 = vpop.f32.mrf.mxu0
      %v691 = vpop.f32.mrf.mxu0
      %v692 = vpop.f32.mrf.mxu0
      %693 = vdwg.mxu0
      %695 = vrot.lane.b32.xlu0 %v582, 96
      %v696 = vpop.permute.xlu0 %695
      %698 = vrot.lane.b32.xlu0 %v583, 96
      %v699 = vpop.permute.xlu0 %698
      %v701 = vsel %vm585, %v696, 0
      %v704 = vsel %vm585, %v699, 0
      %706 = vmatprep.subr.bf16.mxu0 0
      %707 = vmatpush1.bf16.xpose.msra.mxu0 0
      %708 = vmatprep.subr.bf16.mxu0 0
      %709 = vmatpush1.bf16.xpose.msra.mxu0 0
      %710 = vmatprep.subr.bf16.mxu0 0
      %711 = vmatpush1.bf16.xpose.msra.mxu0 0
      %712 = vmatprep.subr.bf16.mxu0 0
      %713 = vmatpush1.bf16.xpose.msra.mxu0 0
      %714 = vmatprep.subr.bf16.mxu0 0
      %715 = vmatpush1.bf16.xpose.msra.mxu0 0
      %716 = vmatprep.subr.bf16.mxu0 0
      %717 = vmatpush1.bf16.xpose.msra.mxu0 0
      %718 = vmatprep.subr.bf16.mxu0 0
      %719 = vmatpush1.bf16.xpose.msra.mxu0 0
      %720 = vmatprep.subr.bf16.mxu0 0
      %721 = vmatpush1.bf16.xpose.msra.mxu0 %v704
      %722 = vmatprep.subr.bf16.mxu0 0
      %723 = vmatpush2.bf16.xpose.msra.mxu0 0
      %724 = vmatprep.subr.bf16.mxu0 0
      %725 = vmatpush2.bf16.xpose.msra.mxu0 0
      %726 = vmatprep.subr.bf16.mxu0 0
      %727 = vmatpush2.bf16.xpose.msra.mxu0 0
      %728 = vmatprep.subr.bf16.mxu0 0
      %729 = vmatpush2.bf16.xpose.msra.mxu0 0
      %730 = vmatprep.subr.bf16.mxu0 0
      %731 = vmatpush2.bf16.xpose.msra.mxu0 0
      %732 = vmatprep.subr.bf16.mxu0 0
      %733 = vmatpush2.bf16.xpose.msra.mxu0 0
      %734 = vmatprep.subr.bf16.mxu0 0
      %735 = vmatpush2.bf16.xpose.msra.mxu0 0
      %736 = vmatprep.subr.bf16.mxu0 0
      %737 = vmatpush2.bf16.xpose.msra.mxu0 0
      %738 = vmatprep.mubr.bf16.mxu0 0
      %739 = vmatmul.mubr.bf16.gmra.mxu0 %v701
      %v740 = vpop.f32.mrf.mxu0
      %v741 = vadd.f32 0.0, %v740
      %v742 = vpop.f32.mrf.mxu0
      %v743 = vpop.f32.mrf.mxu0
      %v744 = vpop.f32.mrf.mxu0
      %745 = vdwg.mxu0
      %v746 = vmul.f32 %v741, 0.17677669
      %v747 = vadd.f32 %v746, %v580
      %v748 = vsel %vm634, %v747, -inf
      %749 = vmax.xlane.f32.xlu0 %v748
      %v750 = vpop.xlane.xlu0 %749
      %v751 = vsub.f32 %v747, %v750
      %v752 = vmul.f32 %v751, 1.442695
      %v753 = vpow.pop %v752
      %v754 = vsel %vm634, %v753, 0.0
      %755 = vadd.xlane.f32.xlu0 %v754
      %v756 = vpop.xlane.xlu0 %755
      %v757 = vrcp.pop %v756
      %v758 = vmul.f32 %v753, %v757
      %v759 = vpack.c.bf16 %v758, %v758
      %761 = vrot.lane.b32.xlu0 %v584, 96
      %v762 = vpop.permute.xlu0 %761
      %v764 = vsel %vm634, %v759, 0
      %v767 = vsel %vm650, %v762, 0
      %769 = vmatprep.subr.bf16.mxu0 0
      %770 = vmatpush1.bf16.msra.mxu0 0
      %771 = vmatprep.subr.bf16.mxu0 0
      %772 = vmatpush1.bf16.msra.mxu0 0
      %773 = vmatprep.subr.bf16.mxu0 0
      %774 = vmatpush1.bf16.msra.mxu0 0
      %775 = vmatprep.subr.bf16.mxu0 0
      %776 = vmatpush1.bf16.msra.mxu0 0
      %777 = vmatprep.subr.bf16.mxu0 0
      %778 = vmatpush1.bf16.msra.mxu0 0
      %779 = vmatprep.subr.bf16.mxu0 0
      %780 = vmatpush1.bf16.msra.mxu0 0
      %781 = vmatprep.subr.bf16.mxu0 0
      %782 = vmatpush1.bf16.msra.mxu0 0
      %783 = vmatprep.subr.bf16.mxu0 0
      %784 = vmatpush1.bf16.msra.mxu0 %v767
      %785 = vmatprep.subr.bf16.mxu0 0
      %786 = vmatpush2.bf16.msra.mxu0 0
      %787 = vmatprep.subr.bf16.mxu0 0
      %788 = vmatpush2.bf16.msra.mxu0 0
      %789 = vmatprep.subr.bf16.mxu0 0
      %790 = vmatpush2.bf16.msra.mxu0 0
      %791 = vmatprep.subr.bf16.mxu0 0
      %792 = vmatpush2.bf16.msra.mxu0 0
      %793 = vmatprep.subr.bf16.mxu0 0
      %794 = vmatpush2.bf16.msra.mxu0 0
      %795 = vmatprep.subr.bf16.mxu0 0
      %796 = vmatpush2.bf16.msra.mxu0 0
      %797 = vmatprep.subr.bf16.mxu0 0
      %798 = vmatpush2.bf16.msra.mxu0 0
      %799 = vmatprep.subr.bf16.mxu0 0
      %800 = vmatpush2.bf16.msra.mxu0 0
      %801 = vmatprep.mubr.bf16.mxu0 0
      %802 = vmatmul.mubr.bf16.gmra.mxu0 %v764
      %v803 = vpop.f32.mrf.mxu0
      %v804 = vadd.f32 0.0, %v803
      %v805 = vpop.f32.mrf.mxu0
      %v806 = vpop.f32.mrf.mxu0
      %v807 = vpop.f32.mrf.mxu0
      %808 = vdwg.mxu0
      %809 = vrot.lane.b32.xlu0 %v582, 64
      %v810 = vpop.permute.xlu0 %809
      %811 = vrot.lane.b32.xlu0 %v583, 64
      %v812 = vpop.permute.xlu0 %811
      %v814 = vsel %vm585, %v810, 0
      %v817 = vsel %vm585, %v812, 0
      %819 = vmatprep.subr.bf16.mxu0 0
      %820 = vmatpush1.bf16.xpose.msra.mxu0 0
      %821 = vmatprep.subr.bf16.mxu0 0
      %822 = vmatpush1.bf16.xpose.msra.mxu0 0
      %823 = vmatprep.subr.bf16.mxu0 0
      %824 = vmatpush1.bf16.xpose.msra.mxu0 0
      %825 = vmatprep.subr.bf16.mxu0 0
      %826 = vmatpush1.bf16.xpose.msra.mxu0 0
      %827 = vmatprep.subr.bf16.mxu0 0
      %828 = vmatpush1.bf16.xpose.msra.mxu0 0
      %829 = vmatprep.subr.bf16.mxu0 0
      %830 = vmatpush1.bf16.xpose.msra.mxu0 0
      %831 = vmatprep.subr.bf16.mxu0 0
      %832 = vmatpush1.bf16.xpose.msra.mxu0 0
      %833 = vmatprep.subr.bf16.mxu0 0
      %834 = vmatpush1.bf16.xpose.msra.mxu0 %v817
      %835 = vmatprep.subr.bf16.mxu0 0
      %836 = vmatpush2.bf16.xpose.msra.mxu0 0
      %837 = vmatprep.subr.bf16.mxu0 0
      %838 = vmatpush2.bf16.xpose.msra.mxu0 0
      %839 = vmatprep.subr.bf16.mxu0 0
      %840 = vmatpush2.bf16.xpose.msra.mxu0 0
      %841 = vmatprep.subr.bf16.mxu0 0
      %842 = vmatpush2.bf16.xpose.msra.mxu0 0
      %843 = vmatprep.subr.bf16.mxu0 0
      %844 = vmatpush2.bf16.xpose.msra.mxu0 0
      %845 = vmatprep.subr.bf16.mxu0 0
      %846 = vmatpush2.bf16.xpose.msra.mxu0 0
      %847 = vmatprep.subr.bf16.mxu0 0
      %848 = vmatpush2.bf16.xpose.msra.mxu0 0
      %849 = vmatprep.subr.bf16.mxu0 0
      %850 = vmatpush2.bf16.xpose.msra.mxu0 0
      %851 = vmatprep.mubr.bf16.mxu0 0
      %852 = vmatmul.mubr.bf16.gmra.mxu0 %v814
      %v853 = vpop.f32.mrf.mxu0
      %v854 = vadd.f32 0.0, %v853
      %v855 = vpop.f32.mrf.mxu0
      %v856 = vpop.f32.mrf.mxu0
      %v857 = vpop.f32.mrf.mxu0
      %858 = vdwg.mxu0
      %v859 = vmul.f32 %v854, 0.17677669
      %v860 = vadd.f32 %v859, %v580
      %v861 = vsel %vm634, %v860, -inf
      %862 = vmax.xlane.f32.xlu0 %v861
      %v863 = vpop.xlane.xlu0 %862
      %v864 = vsub.f32 %v860, %v863
      %v865 = vmul.f32 %v864, 1.442695
      %v866 = vpow.pop %v865
      %v867 = vsel %vm634, %v866, 0.0
      %868 = vadd.xlane.f32.xlu0 %v867
      %v869 = vpop.xlane.xlu0 %868
      %v870 = vrcp.pop %v869
      %v871 = vmul.f32 %v866, %v870
      %v872 = vpack.c.bf16 %v871, %v871
      %873 = vrot.lane.b32.xlu0 %v584, 64
      %v874 = vpop.permute.xlu0 %873
      %v876 = vsel %vm634, %v872, 0
      %v879 = vsel %vm650, %v874, 0
      %881 = vmatprep.subr.bf16.mxu0 0
      %882 = vmatpush1.bf16.msra.mxu0 0
      %883 = vmatprep.subr.bf16.mxu0 0
      %884 = vmatpush1.bf16.msra.mxu0 0
      %885 = vmatprep.subr.bf16.mxu0 0
      %886 = vmatpush1.bf16.msra.mxu0 0
      %887 = vmatprep.subr.bf16.mxu0 0
      %888 = vmatpush1.bf16.msra.mxu0 0
      %889 = vmatprep.subr.bf16.mxu0 0
      %890 = vmatpush1.bf16.msra.mxu0 0
      %891 = vmatprep.subr.bf16.mxu0 0
      %892 = vmatpush1.bf16.msra.mxu0 0
      %893 = vmatprep.subr.bf16.mxu0 0
      %894 = vmatpush1.bf16.msra.mxu0 0
      %895 = vmatprep.subr.bf16.mxu0 0
      %896 = vmatpush1.bf16.msra.mxu0 %v879
      %897 = vmatprep.subr.bf16.mxu0 0
      %898 = vmatpush2.bf16.msra.mxu0 0
      %899 = vmatprep.subr.bf16.mxu0 0
      %900 = vmatpush2.bf16.msra.mxu0 0
      %901 = vmatprep.subr.bf16.mxu0 0
      %902 = vmatpush2.bf16.msra.mxu0 0
      %903 = vmatprep.subr.bf16.mxu0 0
      %904 = vmatpush2.bf16.msra.mxu0 0
      %905 = vmatprep.subr.bf16.mxu0 0
      %906 = vmatpush2.bf16.msra.mxu0 0
      %907 = vmatprep.subr.bf16.mxu0 0
      %908 = vmatpush2.bf16.msra.mxu0 0
      %909 = vmatprep.subr.bf16.mxu0 0
      %910 = vmatpush2.bf16.msra.mxu0 0
      %911 = vmatprep.subr.bf16.mxu0 0
      %912 = vmatpush2.bf16.msra.mxu0 0
      %913 = vmatprep.mubr.bf16.mxu0 0
      %914 = vmatmul.mubr.bf16.gmra.mxu0 %v876
      %v915 = vpop.f32.mrf.mxu0
      %v916 = vadd.f32 0.0, %v915
      %v917 = vpop.f32.mrf.mxu0
      %v918 = vpop.f32.mrf.mxu0
      %v919 = vpop.f32.mrf.mxu0
      %920 = vdwg.mxu0
      %921 = vrot.lane.b32.xlu0 %v582, 32
      %v922 = vpop.permute.xlu0 %921
      %923 = vrot.lane.b32.xlu0 %v583, 32
      %v924 = vpop.permute.xlu0 %923
      %v926 = vsel %vm585, %v922, 0
      %v929 = vsel %vm585, %v924, 0
      %931 = vmatprep.subr.bf16.mxu0 0
      %932 = vmatpush1.bf16.xpose.msra.mxu0 0
      %933 = vmatprep.subr.bf16.mxu0 0
      %934 = vmatpush1.bf16.xpose.msra.mxu0 0
      %935 = vmatprep.subr.bf16.mxu0 0
      %936 = vmatpush1.bf16.xpose.msra.mxu0 0
      %937 = vmatprep.subr.bf16.mxu0 0
      %938 = vmatpush1.bf16.xpose.msra.mxu0 0
      %939 = vmatprep.subr.bf16.mxu0 0
      %940 = vmatpush1.bf16.xpose.msra.mxu0 0
      %941 = vmatprep.subr.bf16.mxu0 0
      %942 = vmatpush1.bf16.xpose.msra.mxu0 0
      %943 = vmatprep.subr.bf16.mxu0 0
      %944 = vmatpush1.bf16.xpose.msra.mxu0 0
      %945 = vmatprep.subr.bf16.mxu0 0
      %946 = vmatpush1.bf16.xpose.msra.mxu0 %v929
      %947 = vmatprep.subr.bf16.mxu0 0
      %948 = vmatpush2.bf16.xpose.msra.mxu0 0
      %949 = vmatprep.subr.bf16.mxu0 0
      %950 = vmatpush2.bf16.xpose.msra.mxu0 0
      %951 = vmatprep.subr.bf16.mxu0 0
      %952 = vmatpush2.bf16.xpose.msra.mxu0 0
      %953 = vmatprep.subr.bf16.mxu0 0
      %954 = vmatpush2.bf16.xpose.msra.mxu0 0
      %955 = vmatprep.subr.bf16.mxu0 0
      %956 = vmatpush2.bf16.xpose.msra.mxu0 0
      %957 = vmatprep.subr.bf16.mxu0 0
      %958 = vmatpush2.bf16.xpose.msra.mxu0 0
      %959 = vmatprep.subr.bf16.mxu0 0
      %960 = vmatpush2.bf16.xpose.msra.mxu0 0
      %961 = vmatprep.subr.bf16.mxu0 0
      %962 = vmatpush2.bf16.xpose.msra.mxu0 0
      %963 = vmatprep.mubr.bf16.mxu0 0
      %964 = vmatmul.mubr.bf16.gmra.mxu0 %v926
      %v965 = vpop.f32.mrf.mxu0
      %v966 = vadd.f32 0.0, %v965
      %v967 = vpop.f32.mrf.mxu0
      %v968 = vpop.f32.mrf.mxu0
      %v969 = vpop.f32.mrf.mxu0
      %970 = vdwg.mxu0
      %v971 = vmul.f32 %v966, 0.17677669
      %v972 = vadd.f32 %v971, %v580
      %v973 = vsel %vm634, %v972, -inf
      %974 = vmax.xlane.f32.xlu0 %v973
      %v975 = vpop.xlane.xlu0 %974
      %v976 = vsub.f32 %v972, %v975
      %v977 = vmul.f32 %v976, 1.442695
      %v978 = vpow.pop %v977
      %v979 = vsel %vm634, %v978, 0.0
      %980 = vadd.xlane.f32.xlu0 %v979
      %v981 = vpop.xlane.xlu0 %980
      %v982 = vrcp.pop %v981
      %v983 = vmul.f32 %v978, %v982
      %v984 = vpack.c.bf16 %v983, %v983
      %985 = vrot.lane.b32.xlu0 %v584, 32
      %v986 = vpop.permute.xlu0 %985
      %v988 = vsel %vm634, %v984, 0
      %v991 = vsel %vm650, %v986, 0
      %993 = vmatprep.subr.bf16.mxu0 0
      %994 = vmatpush1.bf16.msra.mxu0 0
      %995 = vmatprep.subr.bf16.mxu0 0
      %996 = vmatpush1.bf16.msra.mxu0 0
      %997 = vmatprep.subr.bf16.mxu0 0
      %998 = vmatpush1.bf16.msra.mxu0 0
      %999 = vmatprep.subr.bf16.mxu0 0
      %1000 = vmatpush1.bf16.msra.mxu0 0
      %1001 = vmatprep.subr.bf16.mxu0 0
      %1002 = vmatpush1.bf16.msra.mxu0 0
      %1003 = vmatprep.subr.bf16.mxu0 0
      %1004 = vmatpush1.bf16.msra.mxu0 0
      %1005 = vmatprep.subr.bf16.mxu0 0
      %1006 = vmatpush1.bf16.msra.mxu0 0
      %1007 = vmatprep.subr.bf16.mxu0 0
      %1008 = vmatpush1.bf16.msra.mxu0 %v991
      %1009 = vmatprep.subr.bf16.mxu0 0
      %1010 = vmatpush2.bf16.msra.mxu0 0
      %1011 = vmatprep.subr.bf16.mxu0 0
      %1012 = vmatpush2.bf16.msra.mxu0 0
      %1013 = vmatprep.subr.bf16.mxu0 0
      %1014 = vmatpush2.bf16.msra.mxu0 0
      %1015 = vmatprep.subr.bf16.mxu0 0
      %1016 = vmatpush2.bf16.msra.mxu0 0
      %1017 = vmatprep.subr.bf16.mxu0 0
      %1018 = vmatpush2.bf16.msra.mxu0 0
      %1019 = vmatprep.subr.bf16.mxu0 0
      %1020 = vmatpush2.bf16.msra.mxu0 0
      %1021 = vmatprep.subr.bf16.mxu0 0
      %1022 = vmatpush2.bf16.msra.mxu0 0
      %1023 = vmatprep.subr.bf16.mxu0 0
      %1024 = vmatpush2.bf16.msra.mxu0 0
      %1025 = vmatprep.mubr.bf16.mxu0 0
      %1026 = vmatmul.mubr.bf16.gmra.mxu0 %v988
      %v1027 = vpop.f32.mrf.mxu0
      %v1028 = vadd.f32 0.0, %v1027
      %v1029 = vpop.f32.mrf.mxu0
      %v1030 = vpop.f32.mrf.mxu0
      %v1031 = vpop.f32.mrf.mxu0
      %1032 = vdwg.mxu0
      %1034 = vrot.lane.b32.xlu0 %v804, 32
      %v1035 = vpop.permute.xlu0 %1034
      %1038 = vrot.lane.b32.xlu0 %v916, 64
      %v1039 = vpop.permute.xlu0 %1038
      %1042 = vrot.lane.b32.xlu0 %v1028, 96
      %v1043 = vpop.permute.xlu0 %1042
      %v1045 = vsel %vm585, %v689, %v1035
      %vm1046 = vcmask 523264
      %v1047 = vsel %vm1046, %v1045, %v1039
      %vm1048 = vcmask 785408
      %v1049 = vsel %vm1048, %v1047, %v1043
      %v1050 = vpack.c.bf16 %v1049, %v1049
      %v1051 = vld [vmem:[%s4] sm:$0xf]
      %v1052 = vld [vmem:[%s4 + $0x4] sm:$0xf]
      %v1053 = vld [vmem:[%s4 + $0x8] sm:$0xf]
      %v1054 = vld [vmem:[%s4 + $0xc] sm:$0xf]
      %v1055 = vld [vmem:[%s4 + $0x10] sm:$0xf]
      %v1056 = vld [vmem:[%s4 + $0x14] sm:$0xf]
      %v1057 = vld [vmem:[%s4 + $0x18] sm:$0xf]
      %v1058 = vld [vmem:[%s4 + $0x1c] sm:$0xf]
      %v1059 = vld [vmem:[%s4 + $0x20] sm:$0xf]
      %v1060 = vld [vmem:[%s4 + $0x24] sm:$0xf]
      %v1061 = vld [vmem:[%s4 + $0x28] sm:$0xf]
      %v1062 = vld [vmem:[%s4 + $0x2c] sm:$0xf]
      %v1063 = vld [vmem:[%s4 + $0x30] sm:$0xf]
      %v1064 = vld [vmem:[%s4 + $0x34] sm:$0xf]
      %v1065 = vld [vmem:[%s4 + $0x38] sm:$0xf]
      %v1066 = vld [vmem:[%s4 + $0x3c] sm:$0xf]
      %v1067 = vld [vmem:[%s5] sm:$0x1]
      %v1069 = vlaneseq
      %v1070 = vshrl.u32 %v1069, 7
      %v1071 = vsub.s32 0, %v1070
      %v1072 = vrot.slane %v1067, %v1071
      %v1090 = vunpack.c.l.b16 %v1051
      %v1091 = vunpack.c.l.b16 %v1052
      %v1092 = vunpack.c.l.b16 %v1053
      %v1093 = vunpack.c.l.b16 %v1054
      %v1094 = vunpack.c.l.b16 %v1055
      %v1095 = vunpack.c.l.b16 %v1056
      %v1096 = vunpack.c.l.b16 %v1057
      %v1097 = vunpack.c.l.b16 %v1058
      %v1098 = vunpack.c.l.b16 %v1059
      %v1099 = vunpack.c.l.b16 %v1060
      %v1100 = vunpack.c.l.b16 %v1061
      %v1101 = vunpack.c.l.b16 %v1062
      %v1102 = vunpack.c.l.b16 %v1063
      %v1103 = vunpack.c.l.b16 %v1064
      %v1104 = vunpack.c.l.b16 %v1065
      %v1105 = vunpack.c.l.b16 %v1066
      %v1106 = vpack.c.b16 %v1091, %v1090
      %v1107 = vpack.c.b16 %v1093, %v1092
      %v1108 = vpack.c.b16 %v1095, %v1094
      %v1109 = vpack.c.b16 %v1097, %v1096
      %v1110 = vpack.c.b16 %v1099, %v1098
      %v1111 = vpack.c.b16 %v1101, %v1100
      %v1112 = vpack.c.b16 %v1103, %v1102
      %v1113 = vpack.c.b16 %v1105, %v1104
      %1122 = vmatprep.subr.bf16.mxu0 0
      %1123 = vmatpush1.bf16.msra.mxu0 %v1113
      %1124 = vmatprep.subr.bf16.mxu0 0
      %1125 = vmatpush1.bf16.msra.mxu0 %v1112
      %1126 = vmatprep.subr.bf16.mxu0 0
      %1127 = vmatpush1.bf16.msra.mxu0 %v1111
      %1128 = vmatprep.subr.bf16.mxu0 0
      %1129 = vmatpush1.bf16.msra.mxu0 %v1110
      %1130 = vmatprep.subr.bf16.mxu0 0
      %1131 = vmatpush1.bf16.msra.mxu0 %v1109
      %1132 = vmatprep.subr.bf16.mxu0 0
      %1133 = vmatpush1.bf16.msra.mxu0 %v1108
      %1134 = vmatprep.subr.bf16.mxu0 0
      %1135 = vmatpush1.bf16.msra.mxu0 %v1107
      %1136 = vmatprep.subr.bf16.mxu0 0
      %1137 = vmatpush1.bf16.msra.mxu0 %v1106
      %1138 = vmatprep.subr.bf16.mxu0 0
      %1139 = vmatpush2.bf16.msra.mxu0 0
      %1140 = vmatprep.subr.bf16.mxu0 0
      %1141 = vmatpush2.bf16.msra.mxu0 0
      %1142 = vmatprep.subr.bf16.mxu0 0
      %1143 = vmatpush2.bf16.msra.mxu0 0
      %1144 = vmatprep.subr.bf16.mxu0 0
      %1145 = vmatpush2.bf16.msra.mxu0 0
      %1146 = vmatprep.subr.bf16.mxu0 0
      %1147 = vmatpush2.bf16.msra.mxu0 0
      %1148 = vmatprep.subr.bf16.mxu0 0
      %1149 = vmatpush2.bf16.msra.mxu0 0
      %1150 = vmatprep.subr.bf16.mxu0 0
      %1151 = vmatpush2.bf16.msra.mxu0 0
      %1152 = vmatprep.subr.bf16.mxu0 0
      %1153 = vmatpush2.bf16.msra.mxu0 0
      %1154 = vmatprep.mubr.bf16.mxu0 0
      %1155 = vmatmul.mubr.bf16.gmra.mxu0 %v1050
      %v1156 = vpop.f32.mrf.mxu0
      %v1157 = vadd.f32 %v1072, %v1156
      %v1158 = vpop.f32.mrf.mxu0
      %v1159 = vpop.f32.mrf.mxu0
      %v1160 = vpop.f32.mrf.mxu0
      %1161 = vdwg.mxu0
      %v1162 = vunpack.c.l.bf16 %v316
      %v1163 = vadd.f32 %v1157, %v1162
      %1164 = vadd.xlane.f32.xlu0 %v1163
      %v1165 = vpop.xlane.xlu0 %1164
      %v1166 = vrcp.pop 128.0
      %v1167 = vmul.f32 %v1165, %v1166
      %v1168 = vsub.f32 %v1163, %v1167
      %v1169 = vmul.f32 %v1168, %v1168
      %1170 = vadd.xlane.f32.xlu0 %v1169
      %v1171 = vpop.xlane.xlu0 %1170
      %v1172 = vmul.f32 %v1171, %v1166
      %v1173 = vadd.f32 %v1172, 1e-12
      %v1174 = vrsqrt.pop %v1173
      %v1175 = vmul.f32 %v1168, %v1174
      %v1176 = vld [vmem:[%s6] sm:$0x1]
      %v1178 = vlaneseq
      %v1179 = vshrl.u32 %v1178, 7
      %v1180 = vsub.s32 0, %v1179
      %v1181 = vrot.slane %v1176, %v1180
      %v1183 = vmul.f32 %v1175, %v1181
      %v1184 = vld [vmem:[%s7] sm:$0x1]
      %v1186 = vlaneseq
      %v1187 = vshrl.u32 %v1186, 7
      %v1188 = vsub.s32 0, %v1187
      %v1189 = vrot.slane %v1184, %v1188
      %v1191 = vadd.f32 %v1183, %v1189
      %v1192 = vpack.c.bf16 %v1191, %v1191
      %1193 = vst [vmem:[%s314] sm:$0xf] %v1192
      %p1194 = scmp.lt.s32.totalorder %s19, 1
      %s1195 = scalar_select %p1194, %s19, 1
      %s1196 = smul.addr %s1195, 4
      %s1197 = scalar_lea.vmem %s8, %s1196
      // Predicated region
      $region53: #{bert_forward.8} parent=51 // pred_check
        %p1198 = pneg %p215
      $region54: #{bert_forward.8} parent=51 // pred_check_branch
        %1200 = sbr.rel (%p1198) target = $region56
      $region55: #{bert_forward.8} parent=51 // pred_region
        _
      $region56: #{bert_forward.8} parent=51 // pred_fallthru
        _
    $region52: #{bert_forward.8} parent=5 // pred_fallthru
      _
    %p1201 = scmp.le.s32.totalorder 2, %s14
    // Predicated region
    $region57: #{bert_forward.8} parent=5 // pred_check
      %p1202 = pneg %p1201
    $region58: #{bert_forward.8} parent=5 // pred_check_branch
      %1204 = sbr.rel (%p1202) target = $region60
    $region59: #{bert_forward.8} parent=5 // pred_region
      %s1205 = ssub.s32 %s14, 2
      // Predicated region
      $region61: #{bert_forward.8} parent=59 // pred_check
        %p1206 = pneg %p221
      $region62: #{bert_forward.8} parent=59 // pred_check_branch
        %1208 = sbr.rel (%p1206) target = $region64
      $region63: #{bert_forward.8} parent=59 // pred_region
        %p1209 = scmp.lt.s32.totalorder %s20, 1
        %s1210 = scalar_select %p1209, %s20, 1
        %s1211 = smul.addr %s1210, 4
        %s1212 = scalar_lea.vmem %s8, %s1211
      $region64: #{bert_forward.8} parent=59 // pred_fallthru
        _
    $region60: #{bert_forward.8} parent=5 // pred_fallthru
      _
  $region6: #{bert_forward.8} parent=0 // loop_footer
    %s18 = sadd.s32 1, %s14
  $region7: #{bert_forward.8} parent=0 // loop_footer_branch
    %13 = sbr.rel target = $region3
  $region8: #{bert_forward.8} parent=0 // loop_exit
    _

// kernel: bert_forward.13
$region0: #{bert_forward.13}
  #allocation0 [shape = 'u32[]', space=smem, size = 0x4, offset = 0x4, fixed_abs, tag = 'smem constant byte address 0x4 - core index']
  #allocation1 [shape = 'u32[144,128]{1,0:T(1,128)}', space=vmem, size = 0x12000, scoped, tag = 'internal scratch']
  %s0 = inlined_call_operand.vmem [shape: f32[16,128], index: 0, kind: input, shape index: {}]
  %s1 = inlined_call_operand.vmem [shape: f32[16,1], index: 1, kind: input, shape index: {}]
  %s2 = inlined_call_operand.vmem [shape: f32[1,128], index: 2, kind: output, shape index: {}]
  %s3 = sld [smem:[#allocation0]]
  $region22: #{bert_forward.13} parent=0
    _
  %s5 = ssub.s32 1, %s3
  %s6 = scalar_select 0, %s5, %s3
  // Predicated region
  $region2: #{bert_forward.13} parent=0 // pred_check
    _
  $region3: #{bert_forward.13} parent=0 // pred_check_branch
    %8 = sbr.rel (0) target = $region5
  $region4: #{bert_forward.13} parent=0 // pred_region
    _
  $region5: #{bert_forward.13} parent=0 // pred_fallthru
    _
  // Predicated region
  $region6: #{bert_forward.13} parent=0 // pred_check
    _
  $region7: #{bert_forward.13} parent=0 // pred_check_branch
    %10 = sbr.rel (0) target = $region9
  $region8: #{bert_forward.13} parent=0 // pred_region
    _
  $region9: #{bert_forward.13} parent=0 // pred_fallthru
    _
  %p11 = scmp.eq.s32.totalorder 0, 0
  // Predicated region
  $region10: #{bert_forward.13} parent=0 // pred_check
    %p12 = pneg %p11
  $region11: #{bert_forward.13} parent=0 // pred_check_branch
    %14 = sbr.rel (%p12) target = $region13
  $region12: #{bert_forward.13} parent=0 // pred_region
    %15 = vst [vmem:[%s2] sm:$0x1] 0.0
  $region13: #{bert_forward.13} parent=0 // pred_fallthru
    _
  %v16 = vld [vmem:[%s0] sm:$0xff]
  %v17 = vld [vmem:[%s0 + $0x8] sm:$0xff]
  %v18 = vld [vmem:[%s1] sm:$0xff]
  %v19 = vld [vmem:[%s1 + $0x8] sm:$0xff]
  %vm20 = vcmask 15360
  %v21 = vsel %vm20, %v16, -inf
  %22 = vmax.xlane.f32.xlu0 %v21
  %v23 = vpop.xlane.xlu0 %22
  %v24 = vsel %vm20, %v17, -inf
  %25 = vmax.xlane.f32.xlu0 %v24
  %v26 = vpop.xlane.xlu0 %25
  %v27 = vsub.f32 %v16, %v23
  %v28 = vsub.f32 %v17, %v26
  %v29 = vmul.f32 %v27, 1.442695
  %v30 = vpow.pop %v29
  %v31 = vmul.f32 %v28, 1.442695
  %v32 = vpow.pop %v31
  %v33 = vsel %vm20, %v30, 0.0
  %34 = vadd.xlane.f32.xlu0 %v33
  %v35 = vpop.xlane.xlu0 %34
  %v36 = vsel %vm20, %v32, 0.0
  %37 = vadd.xlane.f32.xlu0 %v36
  %v38 = vpop.xlane.xlu0 %37
  %v39 = vlog2.pop %v35
  %v40 = vmul.f32 %v39, 0.6931472
  %v41 = vlog2.pop %v38
  %v42 = vmul.f32 %v41, 0.6931472
  %v43 = vadd.f32 %v23, %v40
  %v44 = vadd.f32 %v26, %v42
  %v45 = vsub.f32 1.0, %v18
  %v46 = vsub.f32 1.0, %v19
  %v47 = vmul.f32 %v45, %v16
  %v48 = vmul.f32 %v46, %v17
  %51 = vrot.lane.b32.xlu0 %v16, 127
  %v52 = vpop.permute.xlu0 %51
  %53 = vrot.lane.b32.xlu0 %v17, 127
  %v54 = vpop.permute.xlu0 %53
  %v57 = vmul.f32 %v18, %v52
  %v58 = vmul.f32 %v19, %v54
  %v59 = vadd.f32 %v47, %v57
  %v60 = vadd.f32 %v48, %v58
  %v61 = vsub.f32 %v43, %v59
  %v62 = vsub.f32 %v44, %v60
  %vm63 = vcmp.eq.f32.partialorder %v18, 1.0
  %vm64 = vcmp.eq.f32.partialorder %v19, 1.0
  %v65 = vsel %vm63, 1, 0
  %v66 = vsel %vm64, 1, 0
  %v67 = vcvt.s32.f32 %v65
  %v68 = vcvt.s32.f32 %v66
  %vm69 = vcmp.eq.f32.partialorder %v18, 0.0
  %vm70 = vcmp.eq.f32.partialorder %v19, 0.0
  %v71 = vsel %vm69, 1, 0
  %v72 = vsel %vm70, 1, 0
  %v73 = vcvt.s32.f32 %v71
  %v74 = vcvt.s32.f32 %v72
  %v75 = vlaneseq
  %v76 = vand.u32 %v75, 127
  %vm77 = vcmp.eq.s32.totalorder %v76, 0
  %v78 = vmul.f32 %v61, %v67
  %v79 = vmul.f32 %v62, %v68
  %81 = vset.pattern.permute.xlu0 0
  %82 = vperm.xlu0 %81, %v78
  %v83 = vpop.permute.xlu0 %82
  %86 = vset.pattern.permute.xlu0 0
  %87 = vperm.xlu0 %86, %v79
  %v88 = vpop.permute.xlu0 %87
  %v90 = vsel %vm77, %v83, 0.0
  %v91 = vsel %vm77, %v88, 0.0
  %vm92 = vcmp.eq.s32.totalorder %v76, 1
  %94 = vset.pattern.permute.xlu0 0
  %95 = vperm.xlu0 %94, %v67
  %v96 = vpop.permute.xlu0 %95
  %99 = vset.pattern.permute.xlu0 0
  %100 = vperm.xlu0 %99, %v68
  %v101 = vpop.permute.xlu0 %100
  %v103 = vsel %vm92, %v96, 0.0
  %v104 = vsel %vm92, %v101, 0.0
  %v105 = vadd.f32 %v90, %v103
  %v106 = vadd.f32 %v91, %v104
  %vm107 = vcmp.eq.s32.totalorder %v76, 2
  %v108 = vmul.f32 %v61, %v73
  %v109 = vmul.f32 %v62, %v74
  %111 = vset.pattern.permute.xlu0 0
  %112 = vperm.xlu0 %111, %v108
  %v113 = vpop.permute.xlu0 %112
  %116 = vset.pattern.permute.xlu0 0
  %117 = vperm.xlu0 %116, %v109
  %v118 = vpop.permute.xlu0 %117
  %v120 = vsel %vm107, %v113, 0.0
  %v121 = vsel %vm107, %v118, 0.0
  %v122 = vadd.f32 %v105, %v120
  %v123 = vadd.f32 %v106, %v121
  %vm124 = vcmp.eq.s32.totalorder %v76, 3
  %126 = vset.pattern.permute.xlu0 0
  %127 = vperm.xlu0 %126, %v73
  %v128 = vpop.permute.xlu0 %127
  %131 = vset.pattern.permute.xlu0 0
  %132 = vperm.xlu0 %131, %v74
  %v133 = vpop.permute.xlu0 %132
  %v135 = vsel %vm124, %v128, 0.0
  %v136 = vsel %vm124, %v133, 0.0
  %v137 = vadd.f32 %v122, %v135
  %v138 = vadd.f32 %v123, %v136
  %v139 = vld [vmem:[%s2] sm:$0x1]
  %v140 = vadd.f32 %v137, %v138
  %v141 = vrot.slane %v140, 4
  %v142 = vadd.f32 %v140, %v141
  %v143 = vrot.slane %v142, 2
  %v144 = vadd.f32 %v142, %v143
  %v145 = vrot.slane %v144, 1
  %v146 = vadd.f32 %v144, %v145
  %v147 = vadd.f32 %v139, %v146
  %148 = vst [vmem:[%s2] sm:$0x1] %v147
  // Predicated region
  $region14: #{bert_forward.13} parent=0 // pred_check
    _
  $region15: #{bert_forward.13} parent=0 // pred_check_branch
    %150 = sbr.rel (0) target = $region17
  $region16: #{bert_forward.13} parent=0 // pred_region
    _
  $region17: #{bert_forward.13} parent=0 // pred_fallthru
    _
  // Predicated region
  $region18: #{bert_forward.13} parent=0 // pred_check
    _
  $region19: #{bert_forward.13} parent=0 // pred_check_branch
    %152 = sbr.rel (0) target = $region21
  $region20: #{bert_forward.13} parent=0 // pred_region
    _
  $region21: #{bert_forward.13} parent=0 // pred_fallthru
    _

</llo_original>
